<compile_context>
chip_gen: v6e
topology: v6e:2x2x1
jax: 0.10.0
libtpu: 0.0.40
codegen_flags: <defaults>
</compile_context>

<pallas_src>
import jax
import jax.numpy as jnp
from jax.experimental import pallas as pl
from jax.experimental.pallas import tpu as pltpu


def _make_kernel(num_layers, T, B, H, D, O_pad):
    def kernel(*refs):
        x_ref, h0_ref, c0_ref = refs[0], refs[1], refs[2]
        layer_refs = refs[3:3 + 3 * num_layers]
        fcw_ref = refs[3 + 3 * num_layers]        # (T*H, O_pad)
        fcb_ref = refs[4 + 3 * num_layers]        # (1, O_pad)
        out_ref = refs[5 + 3 * num_layers]        # (B, O_pad)
        seq_a_ref = refs[6 + 3 * num_layers]      # (T*B, H) inter-layer sequence
        seq_b_ref = refs[7 + 3 * num_layers]      # (B, T*H) last-layer seq (FC layout)

        for l in range(num_layers):
            wih = layer_refs[3 * l][...]          # (Din, 4H), gate order [i,f,o,g]
            whh = layer_refs[3 * l + 1][...]      # (H, 4H)
            b = layer_refs[3 * l + 2][...]        # (1, 4H) = b_ih + b_hh (reordered)

            # ---- hoisted input projection + bias: ONE matmul per layer ----
            if l == 0:
                inp = x_ref[...]                  # (T*B, D), rows ordered t-major
            else:
                inp = seq_a_ref[...]              # (T*B, H) previous layer outputs
            proj = jnp.dot(inp, wih, preferred_element_type=jnp.float32) + b  # (T*B, 4H)

            h = h0_ref[l].astype(jnp.float32)     # (B, H)
            c = c0_ref[l].astype(jnp.float32)     # (B, H)
            last = (l == num_layers - 1)

            # ---- fully unrolled recurrence: only h @ W_hh on the serial chain ----
            for t in range(T):
                gates = proj[t * B:(t + 1) * B, :] + jnp.dot(
                    h, whh, preferred_element_type=jnp.float32)   # (B, 4H)
                sig = jax.nn.sigmoid(gates[:, :3 * H])            # one EUP pass: i,f,o
                i_g = sig[:, :H]
                f_g = sig[:, H:2 * H]
                o_g = sig[:, 2 * H:3 * H]
                g_g = jnp.tanh(gates[:, 3 * H:])                  # one EUP pass: g
                c = f_g * c + i_g * g_g
                h = o_g * jnp.tanh(c)
                if last:
                    # store in (B, T*H) flatten order used by the FC head
                    seq_b_ref[:, t * H:(t + 1) * H] = h
                else:
                    seq_a_ref[t * B:(t + 1) * B, :] = h

        # ---- FC head: single lane-dense matmul, bias folded in ----
        out_ref[...] = (jnp.dot(seq_b_ref[...], fcw_ref[...],
                                preferred_element_type=jnp.float32)
                        + fcb_ref[...]).astype(out_ref.dtype)

    return kernel


def _reorder_gates(m, H):
    """PyTorch packed gate order [i, f, g, o] -> kernel order [i, f, o, g]."""
    return jnp.concatenate([m[:2 * H], m[3 * H:4 * H], m[2 * H:3 * H]], axis=0)


def lstm_model_forward(x, h0, c0, lstm_params, fc_w, fc_b):
    """Forward pass of LSTM_model.

    x: (B, T, D) batch_first input.
    h0, c0: (L, B, H).
    lstm_params: list of L tuples (w_ih (4H, Din), w_hh (4H, H),
                                   b_ih (4H,), b_hh (4H,))   [PyTorch layout].
    fc_w: (O, T*H), fc_b: (O,)                               [PyTorch layout].
    Returns (B, O).
    """
    B, T, D = x.shape
    L = len(lstm_params)
    H = h0.shape[-1]
    O = fc_w.shape[0]
    O_pad = ((O + 127) // 128) * 128

    # Weight prep (done once, outside the kernel): gate reorder, transpose,
    # bias fusion.
    flat = []
    for (w_ih, w_hh, b_ih, b_hh) in lstm_params:
        flat += [_reorder_gates(w_ih, H).T,                # (Din, 4H)
                 _reorder_gates(w_hh, H).T,                # (H, 4H)
                 _reorder_gates(b_ih + b_hh, H)[None, :]]  # (1, 4H)

    # Time-major flattening so the hoisted per-layer projection is one matmul.
    x_flat = jnp.transpose(x, (1, 0, 2)).reshape(T * B, D)

    # Lane-dense padded FC head (extra output columns are zero).
    fc_w_k = jnp.pad(fc_w.T, ((0, 0), (0, O_pad - O)))     # (T*H, O_pad)
    fc_b_k = jnp.pad(fc_b, (0, O_pad - O))[None, :]        # (1, O_pad)

    args = [x_flat, h0, c0] + flat + [fc_w_k, fc_b_k]
    vmem = pl.BlockSpec(memory_space=pltpu.MemorySpace.VMEM)
    out = pl.pallas_call(
        _make_kernel(L, T, B, H, D, O_pad),
        out_shape=jax.ShapeDtypeStruct((B, O_pad), jnp.float32),
        in_specs=[vmem] * len(args),
        out_specs=vmem,
        scratch_shapes=[pltpu.VMEM((T * B, H), jnp.float32),
                        pltpu.VMEM((B, T * H), jnp.float32)],
    )(*args)
    return out[:, :O]


def reference_forward(x, h0, c0, lstm_params, fc_w, fc_b):
    """Pure-JAX replica of the PyTorch forward (PyTorch gate order)."""
    B, T, _ = x.shape
    inp = x
    for l, (w_ih, w_hh, b_ih, b_hh) in enumerate(lstm_params):
        H = w_hh.shape[1]
        h, c = h0[l], c0[l]
        b = b_ih + b_hh
        outs = []
        for t in range(T):
            gates = inp[:, t, :] @ w_ih.T + h @ w_hh.T + b
            i = jax.nn.sigmoid(gates[:, :H])
            f = jax.nn.sigmoid(gates[:, H:2 * H])
            g = jnp.tanh(gates[:, 2 * H:3 * H])
            o = jax.nn.sigmoid(gates[:, 3 * H:])
            c = f * c + i * g
            h = o * jnp.tanh(c)
            outs.append(h)
        inp = jnp.stack(outs, axis=1)
    return inp.reshape(B, -1) @ fc_w.T + fc_b


if __name__ == "__main__":
    # Small shapes consistent with the module's forward:
    # input_=16, hidden_size=32, num_layers=2, sequence_length=8, output_number=10
    B, T, D, H, L, O = 2, 8, 16, 32, 2, 10

    key = jax.random.PRNGKey(0)
    keys = jax.random.split(key, 4 * L + 3)
    bound = 1.0 / jnp.sqrt(H)

    lstm_params = []
    for l in range(L):
        din = D if l == 0 else H
        k0, k1, k2, k3 = keys[4 * l:4 * l + 4]
        w_ih = jax.random.uniform(k0, (4 * H, din), jnp.float32, -bound, bound)
        w_hh = jax.random.uniform(k1, (4 * H, H), jnp.float32, -bound, bound)
        b_ih = jax.random.uniform(k2, (4 * H,), jnp.float32, -bound, bound)
        b_hh = jax.random.uniform(k3, (4 * H,), jnp.float32, -bound, bound)
        lstm_params.append((w_ih, w_hh, b_ih, b_hh))

    fc_bound = 1.0 / jnp.sqrt(H * T)
    fc_w = jax.random.uniform(keys[4 * L], (O, H * T), jnp.float32,
                              -fc_bound, fc_bound)
    fc_b = jax.random.uniform(keys[4 * L + 1], (O,), jnp.float32,
                              -fc_bound, fc_bound)

    x = jax.random.normal(keys[4 * L + 2], (B, T, D), jnp.float32)
    h0 = jnp.zeros((L, B, H), jnp.float32)   # LSTM_model.init()
    c0 = jnp.zeros((L, B, H), jnp.float32)

    out = lstm_model_forward(x, h0, c0, lstm_params, fc_w, fc_b)
    out = jax.block_until_ready(out)

    ref = reference_forward(x, h0, c0, lstm_params, fc_w, fc_b)
    assert out.shape == (B, O)
    assert jnp.allclose(out, ref, atol=1e-4, rtol=1e-4), (out, ref)

    print("KERNEL_OK")
</pallas_src>

<mosaic_0001>
module attributes {stable_mosaic.version = 11 : i64} {
  func.func @kernel(%arg0: memref<16x16xf32, #tpu.memory_space<vmem>>, %arg1: memref<2x2x32xf32, #tpu.memory_space<vmem>>, %arg2: memref<2x2x32xf32, #tpu.memory_space<vmem>>, %arg3: memref<16x128xf32, #tpu.memory_space<vmem>>, %arg4: memref<32x128xf32, #tpu.memory_space<vmem>>, %arg5: memref<1x128xf32, #tpu.memory_space<vmem>>, %arg6: memref<32x128xf32, #tpu.memory_space<vmem>>, %arg7: memref<32x128xf32, #tpu.memory_space<vmem>>, %arg8: memref<1x128xf32, #tpu.memory_space<vmem>>, %arg9: memref<256x128xf32, #tpu.memory_space<vmem>>, %arg10: memref<1x128xf32, #tpu.memory_space<vmem>>, %arg11: memref<2x128xf32, #tpu.memory_space<vmem>>, %arg12: memref<16x32xf32, #tpu.memory_space<vmem>>, %arg13: memref<2x256xf32, #tpu.memory_space<vmem>>) attributes {dimension_semantics = [], scalar_prefetch = 0 : i64, scratch_operands = 2 : i64, tpu.core_type = #tpu.core_type<tc>} {
    %c0 = arith.constant 0 : index
    %c0_0 = arith.constant 0 : index
    %0 = vector.load %arg3[%c0, %c0_0] : memref<16x128xf32, #tpu.memory_space<vmem>>, vector<16x128xf32>
    %c0_1 = arith.constant 0 : index
    %c0_2 = arith.constant 0 : index
    %1 = vector.load %arg4[%c0_1, %c0_2] : memref<32x128xf32, #tpu.memory_space<vmem>>, vector<32x128xf32>
    %c0_3 = arith.constant 0 : index
    %c0_4 = arith.constant 0 : index
    %2 = vector.load %arg5[%c0_3, %c0_4] : memref<1x128xf32, #tpu.memory_space<vmem>>, vector<1x128xf32>
    %c0_5 = arith.constant 0 : index
    %c0_6 = arith.constant 0 : index
    %3 = vector.load %arg0[%c0_5, %c0_6] : memref<16x16xf32, #tpu.memory_space<vmem>>, vector<16x16xf32>
    %cst = arith.constant dense<0.000000e+00> : vector<16x128xf32>
    %4 = tpu.matmul %3, %0, %cst {dimension_numbers = #tpu.dot_dimension_numbers<[1], [0], [0], [1], [0, 0, 1, 1], [], []>} : vector<16x16xf32>, vector<16x128xf32>, vector<16x128xf32> -> vector<16x128xf32>
    %5 = vector.broadcast %2 : vector<1x128xf32> to vector<16x128xf32>
    %6 = arith.addf %4, %5 : vector<16x128xf32>
    %c0_7 = arith.constant 0 : index
    %c0_8 = arith.constant 0 : index
    %c0_9 = arith.constant 0 : index
    %7 = vector.load %arg1[%c0_7, %c0_8, %c0_9] : memref<2x2x32xf32, #tpu.memory_space<vmem>>, vector<1x2x32xf32>
    %8 = vector.shape_cast %7 : vector<1x2x32xf32> to vector<2x32xf32>
    %c0_10 = arith.constant 0 : index
    %c0_11 = arith.constant 0 : index
    %c0_12 = arith.constant 0 : index
    %9 = vector.load %arg2[%c0_10, %c0_11, %c0_12] : memref<2x2x32xf32, #tpu.memory_space<vmem>>, vector<1x2x32xf32>
    %10 = vector.shape_cast %9 : vector<1x2x32xf32> to vector<2x32xf32>
    %11 = vector.extract_strided_slice %6 {offsets = [0, 0], sizes = [2, 128], strides = [1, 1]} : vector<16x128xf32> to vector<2x128xf32>
    %cst_13 = arith.constant dense<0.000000e+00> : vector<2x128xf32>
    %12 = tpu.matmul %8, %1, %cst_13 {dimension_numbers = #tpu.dot_dimension_numbers<[1], [0], [0], [1], [0, 0, 1, 1], [], []>} : vector<2x32xf32>, vector<32x128xf32>, vector<2x128xf32> -> vector<2x128xf32>
    %13 = arith.addf %11, %12 : vector<2x128xf32>
    %14 = vector.extract_strided_slice %13 {offsets = [0, 0], sizes = [2, 96], strides = [1, 1]} : vector<2x128xf32> to vector<2x96xf32>
    %15 = arith.negf %14 : vector<2x96xf32>
    %16 = math.exp %15 : vector<2x96xf32>
    %cst_14 = arith.constant 1.000000e+00 : f32
    %17 = vector.broadcast %cst_14 : f32 to vector<2x96xf32>
    %18 = arith.addf %17, %16 : vector<2x96xf32>
    %19 = arith.divf %17, %18 : vector<2x96xf32>
    %20 = vector.extract_strided_slice %19 {offsets = [0, 0], sizes = [2, 32], strides = [1, 1]} : vector<2x96xf32> to vector<2x32xf32>
    %21 = vector.extract_strided_slice %19 {offsets = [0, 32], sizes = [2, 32], strides = [1, 1]} : vector<2x96xf32> to vector<2x32xf32>
    %22 = vector.extract_strided_slice %19 {offsets = [0, 64], sizes = [2, 32], strides = [1, 1]} : vector<2x96xf32> to vector<2x32xf32>
    %23 = vector.extract_strided_slice %13 {offsets = [0, 96], sizes = [2, 32], strides = [1, 1]} : vector<2x128xf32> to vector<2x32xf32>
    %24 = math.tanh %23 : vector<2x32xf32>
    %25 = arith.mulf %21, %10 : vector<2x32xf32>
    %26 = arith.mulf %20, %24 : vector<2x32xf32>
    %27 = arith.addf %25, %26 : vector<2x32xf32>
    %28 = math.tanh %27 : vector<2x32xf32>
    %29 = arith.mulf %22, %28 : vector<2x32xf32>
    %c0_15 = arith.constant 0 : index
    %c0_16 = arith.constant 0 : index
    %30 = vector.load %arg12[%c0_15, %c0_16] : memref<16x32xf32, #tpu.memory_space<vmem>>, vector<2x32xf32>
    tpu.vector_store %arg12[%c0_15, %c0_16], %29 {strides = array<i32>} : memref<16x32xf32, #tpu.memory_space<vmem>>, vector<2x32xf32>,
    %31 = vector.extract_strided_slice %6 {offsets = [2, 0], sizes = [2, 128], strides = [1, 1]} : vector<16x128xf32> to vector<2x128xf32>
    %cst_17 = arith.constant dense<0.000000e+00> : vector<2x128xf32>
    %32 = tpu.matmul %29, %1, %cst_17 {dimension_numbers = #tpu.dot_dimension_numbers<[1], [0], [0], [1], [0, 0, 1, 1], [], []>} : vector<2x32xf32>, vector<32x128xf32>, vector<2x128xf32> -> vector<2x128xf32>
    %33 = arith.addf %31, %32 : vector<2x128xf32>
    %34 = vector.extract_strided_slice %33 {offsets = [0, 0], sizes = [2, 96], strides = [1, 1]} : vector<2x128xf32> to vector<2x96xf32>
    %35 = arith.negf %34 : vector<2x96xf32>
    %36 = math.exp %35 : vector<2x96xf32>
    %cst_18 = arith.constant 1.000000e+00 : f32
    %37 = vector.broadcast %cst_18 : f32 to vector<2x96xf32>
    %38 = arith.addf %37, %36 : vector<2x96xf32>
    %39 = arith.divf %37, %38 : vector<2x96xf32>
    %40 = vector.extract_strided_slice %39 {offsets = [0, 0], sizes = [2, 32], strides = [1, 1]} : vector<2x96xf32> to vector<2x32xf32>
    %41 = vector.extract_strided_slice %39 {offsets = [0, 32], sizes = [2, 32], strides = [1, 1]} : vector<2x96xf32> to vector<2x32xf32>
    %42 = vector.extract_strided_slice %39 {offsets = [0, 64], sizes = [2, 32], strides = [1, 1]} : vector<2x96xf32> to vector<2x32xf32>
    %43 = vector.extract_strided_slice %33 {offsets = [0, 96], sizes = [2, 32], strides = [1, 1]} : vector<2x128xf32> to vector<2x32xf32>
    %44 = math.tanh %43 : vector<2x32xf32>
    %45 = arith.mulf %41, %27 : vector<2x32xf32>
    %46 = arith.mulf %40, %44 : vector<2x32xf32>
    %47 = arith.addf %45, %46 : vector<2x32xf32>
    %48 = math.tanh %47 : vector<2x32xf32>
    %49 = arith.mulf %42, %48 : vector<2x32xf32>
    %c2 = arith.constant 2 : index
    %c0_19 = arith.constant 0 : index
    %50 = vector.load %arg12[%c2, %c0_19] : memref<16x32xf32, #tpu.memory_space<vmem>>, vector<2x32xf32>
    tpu.vector_store %arg12[%c2, %c0_19], %49 {strides = array<i32>} : memref<16x32xf32, #tpu.memory_space<vmem>>, vector<2x32xf32>,
    %51 = vector.extract_strided_slice %6 {offsets = [4, 0], sizes = [2, 128], strides = [1, 1]} : vector<16x128xf32> to vector<2x128xf32>
    %cst_20 = arith.constant dense<0.000000e+00> : vector<2x128xf32>
    %52 = tpu.matmul %49, %1, %cst_20 {dimension_numbers = #tpu.dot_dimension_numbers<[1], [0], [0], [1], [0, 0, 1, 1], [], []>} : vector<2x32xf32>, vector<32x128xf32>, vector<2x128xf32> -> vector<2x128xf32>
    %53 = arith.addf %51, %52 : vector<2x128xf32>
    %54 = vector.extract_strided_slice %53 {offsets = [0, 0], sizes = [2, 96], strides = [1, 1]} : vector<2x128xf32> to vector<2x96xf32>
    %55 = arith.negf %54 : vector<2x96xf32>
    %56 = math.exp %55 : vector<2x96xf32>
    %cst_21 = arith.constant 1.000000e+00 : f32
    %57 = vector.broadcast %cst_21 : f32 to vector<2x96xf32>
    %58 = arith.addf %57, %56 : vector<2x96xf32>
    %59 = arith.divf %57, %58 : vector<2x96xf32>
    %60 = vector.extract_strided_slice %59 {offsets = [0, 0], sizes = [2, 32], strides = [1, 1]} : vector<2x96xf32> to vector<2x32xf32>
    %61 = vector.extract_strided_slice %59 {offsets = [0, 32], sizes = [2, 32], strides = [1, 1]} : vector<2x96xf32> to vector<2x32xf32>
    %62 = vector.extract_strided_slice %59 {offsets = [0, 64], sizes = [2, 32], strides = [1, 1]} : vector<2x96xf32> to vector<2x32xf32>
    %63 = vector.extract_strided_slice %53 {offsets = [0, 96], sizes = [2, 32], strides = [1, 1]} : vector<2x128xf32> to vector<2x32xf32>
    %64 = math.tanh %63 : vector<2x32xf32>
    %65 = arith.mulf %61, %47 : vector<2x32xf32>
    %66 = arith.mulf %60, %64 : vector<2x32xf32>
    %67 = arith.addf %65, %66 : vector<2x32xf32>
    %68 = math.tanh %67 : vector<2x32xf32>
    %69 = arith.mulf %62, %68 : vector<2x32xf32>
    %c4 = arith.constant 4 : index
    %c0_22 = arith.constant 0 : index
    %70 = vector.load %arg12[%c4, %c0_22] : memref<16x32xf32, #tpu.memory_space<vmem>>, vector<2x32xf32>
    tpu.vector_store %arg12[%c4, %c0_22], %69 {strides = array<i32>} : memref<16x32xf32, #tpu.memory_space<vmem>>, vector<2x32xf32>,
    %71 = vector.extract_strided_slice %6 {offsets = [6, 0], sizes = [2, 128], strides = [1, 1]} : vector<16x128xf32> to vector<2x128xf32>
    %cst_23 = arith.constant dense<0.000000e+00> : vector<2x128xf32>
    %72 = tpu.matmul %69, %1, %cst_23 {dimension_numbers = #tpu.dot_dimension_numbers<[1], [0], [0], [1], [0, 0, 1, 1], [], []>} : vector<2x32xf32>, vector<32x128xf32>, vector<2x128xf32> -> vector<2x128xf32>
    %73 = arith.addf %71, %72 : vector<2x128xf32>
    %74 = vector.extract_strided_slice %73 {offsets = [0, 0], sizes = [2, 96], strides = [1, 1]} : vector<2x128xf32> to vector<2x96xf32>
    %75 = arith.negf %74 : vector<2x96xf32>
    %76 = math.exp %75 : vector<2x96xf32>
    %cst_24 = arith.constant 1.000000e+00 : f32
    %77 = vector.broadcast %cst_24 : f32 to vector<2x96xf32>
    %78 = arith.addf %77, %76 : vector<2x96xf32>
    %79 = arith.divf %77, %78 : vector<2x96xf32>
    %80 = vector.extract_strided_slice %79 {offsets = [0, 0], sizes = [2, 32], strides = [1, 1]} : vector<2x96xf32> to vector<2x32xf32>
    %81 = vector.extract_strided_slice %79 {offsets = [0, 32], sizes = [2, 32], strides = [1, 1]} : vector<2x96xf32> to vector<2x32xf32>
    %82 = vector.extract_strided_slice %79 {offsets = [0, 64], sizes = [2, 32], strides = [1, 1]} : vector<2x96xf32> to vector<2x32xf32>
    %83 = vector.extract_strided_slice %73 {offsets = [0, 96], sizes = [2, 32], strides = [1, 1]} : vector<2x128xf32> to vector<2x32xf32>
    %84 = math.tanh %83 : vector<2x32xf32>
    %85 = arith.mulf %81, %67 : vector<2x32xf32>
    %86 = arith.mulf %80, %84 : vector<2x32xf32>
    %87 = arith.addf %85, %86 : vector<2x32xf32>
    %88 = math.tanh %87 : vector<2x32xf32>
    %89 = arith.mulf %82, %88 : vector<2x32xf32>
    %c6 = arith.constant 6 : index
    %c0_25 = arith.constant 0 : index
    %90 = vector.load %arg12[%c6, %c0_25] : memref<16x32xf32, #tpu.memory_space<vmem>>, vector<2x32xf32>
    tpu.vector_store %arg12[%c6, %c0_25], %89 {strides = array<i32>} : memref<16x32xf32, #tpu.memory_space<vmem>>, vector<2x32xf32>,
    %91 = vector.extract_strided_slice %6 {offsets = [8, 0], sizes = [2, 128], strides = [1, 1]} : vector<16x128xf32> to vector<2x128xf32>
    %cst_26 = arith.constant dense<0.000000e+00> : vector<2x128xf32>
    %92 = tpu.matmul %89, %1, %cst_26 {dimension_numbers = #tpu.dot_dimension_numbers<[1], [0], [0], [1], [0, 0, 1, 1], [], []>} : vector<2x32xf32>, vector<32x128xf32>, vector<2x128xf32> -> vector<2x128xf32>
    %93 = arith.addf %91, %92 : vector<2x128xf32>
    %94 = vector.extract_strided_slice %93 {offsets = [0, 0], sizes = [2, 96], strides = [1, 1]} : vector<2x128xf32> to vector<2x96xf32>
    %95 = arith.negf %94 : vector<2x96xf32>
    %96 = math.exp %95 : vector<2x96xf32>
    %cst_27 = arith.constant 1.000000e+00 : f32
    %97 = vector.broadcast %cst_27 : f32 to vector<2x96xf32>
    %98 = arith.addf %97, %96 : vector<2x96xf32>
    %99 = arith.divf %97, %98 : vector<2x96xf32>
    %100 = vector.extract_strided_slice %99 {offsets = [0, 0], sizes = [2, 32], strides = [1, 1]} : vector<2x96xf32> to vector<2x32xf32>
    %101 = vector.extract_strided_slice %99 {offsets = [0, 32], sizes = [2, 32], strides = [1, 1]} : vector<2x96xf32> to vector<2x32xf32>
    %102 = vector.extract_strided_slice %99 {offsets = [0, 64], sizes = [2, 32], strides = [1, 1]} : vector<2x96xf32> to vector<2x32xf32>
    %103 = vector.extract_strided_slice %93 {offsets = [0, 96], sizes = [2, 32], strides = [1, 1]} : vector<2x128xf32> to vector<2x32xf32>
    %104 = math.tanh %103 : vector<2x32xf32>
    %105 = arith.mulf %101, %87 : vector<2x32xf32>
    %106 = arith.mulf %100, %104 : vector<2x32xf32>
    %107 = arith.addf %105, %106 : vector<2x32xf32>
    %108 = math.tanh %107 : vector<2x32xf32>
    %109 = arith.mulf %102, %108 : vector<2x32xf32>
    %c8 = arith.constant 8 : index
    %c0_28 = arith.constant 0 : index
    %110 = vector.load %arg12[%c8, %c0_28] : memref<16x32xf32, #tpu.memory_space<vmem>>, vector<2x32xf32>
    tpu.vector_store %arg12[%c8, %c0_28], %109 {strides = array<i32>} : memref<16x32xf32, #tpu.memory_space<vmem>>, vector<2x32xf32>,
    %111 = vector.extract_strided_slice %6 {offsets = [10, 0], sizes = [2, 128], strides = [1, 1]} : vector<16x128xf32> to vector<2x128xf32>
    %cst_29 = arith.constant dense<0.000000e+00> : vector<2x128xf32>
    %112 = tpu.matmul %109, %1, %cst_29 {dimension_numbers = #tpu.dot_dimension_numbers<[1], [0], [0], [1], [0, 0, 1, 1], [], []>} : vector<2x32xf32>, vector<32x128xf32>, vector<2x128xf32> -> vector<2x128xf32>
    %113 = arith.addf %111, %112 : vector<2x128xf32>
    %114 = vector.extract_strided_slice %113 {offsets = [0, 0], sizes = [2, 96], strides = [1, 1]} : vector<2x128xf32> to vector<2x96xf32>
    %115 = arith.negf %114 : vector<2x96xf32>
    %116 = math.exp %115 : vector<2x96xf32>
    %cst_30 = arith.constant 1.000000e+00 : f32
    %117 = vector.broadcast %cst_30 : f32 to vector<2x96xf32>
    %118 = arith.addf %117, %116 : vector<2x96xf32>
    %119 = arith.divf %117, %118 : vector<2x96xf32>
    %120 = vector.extract_strided_slice %119 {offsets = [0, 0], sizes = [2, 32], strides = [1, 1]} : vector<2x96xf32> to vector<2x32xf32>
    %121 = vector.extract_strided_slice %119 {offsets = [0, 32], sizes = [2, 32], strides = [1, 1]} : vector<2x96xf32> to vector<2x32xf32>
    %122 = vector.extract_strided_slice %119 {offsets = [0, 64], sizes = [2, 32], strides = [1, 1]} : vector<2x96xf32> to vector<2x32xf32>
    %123 = vector.extract_strided_slice %113 {offsets = [0, 96], sizes = [2, 32], strides = [1, 1]} : vector<2x128xf32> to vector<2x32xf32>
    %124 = math.tanh %123 : vector<2x32xf32>
    %125 = arith.mulf %121, %107 : vector<2x32xf32>
    %126 = arith.mulf %120, %124 : vector<2x32xf32>
    %127 = arith.addf %125, %126 : vector<2x32xf32>
    %128 = math.tanh %127 : vector<2x32xf32>
    %129 = arith.mulf %122, %128 : vector<2x32xf32>
    %c10 = arith.constant 10 : index
    %c0_31 = arith.constant 0 : index
    %130 = vector.load %arg12[%c10, %c0_31] : memref<16x32xf32, #tpu.memory_space<vmem>>, vector<2x32xf32>
    tpu.vector_store %arg12[%c10, %c0_31], %129 {strides = array<i32>} : memref<16x32xf32, #tpu.memory_space<vmem>>, vector<2x32xf32>,
    %131 = vector.extract_strided_slice %6 {offsets = [12, 0], sizes = [2, 128], strides = [1, 1]} : vector<16x128xf32> to vector<2x128xf32>
    %cst_32 = arith.constant dense<0.000000e+00> : vector<2x128xf32>
    %132 = tpu.matmul %129, %1, %cst_32 {dimension_numbers = #tpu.dot_dimension_numbers<[1], [0], [0], [1], [0, 0, 1, 1], [], []>} : vector<2x32xf32>, vector<32x128xf32>, vector<2x128xf32> -> vector<2x128xf32>
    %133 = arith.addf %131, %132 : vector<2x128xf32>
    %134 = vector.extract_strided_slice %133 {offsets = [0, 0], sizes = [2, 96], strides = [1, 1]} : vector<2x128xf32> to vector<2x96xf32>
    %135 = arith.negf %134 : vector<2x96xf32>
    %136 = math.exp %135 : vector<2x96xf32>
    %cst_33 = arith.constant 1.000000e+00 : f32
    %137 = vector.broadcast %cst_33 : f32 to vector<2x96xf32>
    %138 = arith.addf %137, %136 : vector<2x96xf32>
    %139 = arith.divf %137, %138 : vector<2x96xf32>
    %140 = vector.extract_strided_slice %139 {offsets = [0, 0], sizes = [2, 32], strides = [1, 1]} : vector<2x96xf32> to vector<2x32xf32>
    %141 = vector.extract_strided_slice %139 {offsets = [0, 32], sizes = [2, 32], strides = [1, 1]} : vector<2x96xf32> to vector<2x32xf32>
    %142 = vector.extract_strided_slice %139 {offsets = [0, 64], sizes = [2, 32], strides = [1, 1]} : vector<2x96xf32> to vector<2x32xf32>
    %143 = vector.extract_strided_slice %133 {offsets = [0, 96], sizes = [2, 32], strides = [1, 1]} : vector<2x128xf32> to vector<2x32xf32>
    %144 = math.tanh %143 : vector<2x32xf32>
    %145 = arith.mulf %141, %127 : vector<2x32xf32>
    %146 = arith.mulf %140, %144 : vector<2x32xf32>
    %147 = arith.addf %145, %146 : vector<2x32xf32>
    %148 = math.tanh %147 : vector<2x32xf32>
    %149 = arith.mulf %142, %148 : vector<2x32xf32>
    %c12 = arith.constant 12 : index
    %c0_34 = arith.constant 0 : index
    %150 = vector.load %arg12[%c12, %c0_34] : memref<16x32xf32, #tpu.memory_space<vmem>>, vector<2x32xf32>
    tpu.vector_store %arg12[%c12, %c0_34], %149 {strides = array<i32>} : memref<16x32xf32, #tpu.memory_space<vmem>>, vector<2x32xf32>,
    %151 = vector.extract_strided_slice %6 {offsets = [14, 0], sizes = [2, 128], strides = [1, 1]} : vector<16x128xf32> to vector<2x128xf32>
    %cst_35 = arith.constant dense<0.000000e+00> : vector<2x128xf32>
    %152 = tpu.matmul %149, %1, %cst_35 {dimension_numbers = #tpu.dot_dimension_numbers<[1], [0], [0], [1], [0, 0, 1, 1], [], []>} : vector<2x32xf32>, vector<32x128xf32>, vector<2x128xf32> -> vector<2x128xf32>
    %153 = arith.addf %151, %152 : vector<2x128xf32>
    %154 = vector.extract_strided_slice %153 {offsets = [0, 0], sizes = [2, 96], strides = [1, 1]} : vector<2x128xf32> to vector<2x96xf32>
    %155 = arith.negf %154 : vector<2x96xf32>
    %156 = math.exp %155 : vector<2x96xf32>
    %cst_36 = arith.constant 1.000000e+00 : f32
    %157 = vector.broadcast %cst_36 : f32 to vector<2x96xf32>
    %158 = arith.addf %157, %156 : vector<2x96xf32>
    %159 = arith.divf %157, %158 : vector<2x96xf32>
    %160 = vector.extract_strided_slice %159 {offsets = [0, 0], sizes = [2, 32], strides = [1, 1]} : vector<2x96xf32> to vector<2x32xf32>
    %161 = vector.extract_strided_slice %159 {offsets = [0, 32], sizes = [2, 32], strides = [1, 1]} : vector<2x96xf32> to vector<2x32xf32>
    %162 = vector.extract_strided_slice %159 {offsets = [0, 64], sizes = [2, 32], strides = [1, 1]} : vector<2x96xf32> to vector<2x32xf32>
    %163 = vector.extract_strided_slice %153 {offsets = [0, 96], sizes = [2, 32], strides = [1, 1]} : vector<2x128xf32> to vector<2x32xf32>
    %164 = math.tanh %163 : vector<2x32xf32>
    %165 = arith.mulf %161, %147 : vector<2x32xf32>
    %166 = arith.mulf %160, %164 : vector<2x32xf32>
    %167 = arith.addf %165, %166 : vector<2x32xf32>
    %168 = math.tanh %167 : vector<2x32xf32>
    %169 = arith.mulf %162, %168 : vector<2x32xf32>
    %c14 = arith.constant 14 : index
    %c0_37 = arith.constant 0 : index
    %170 = vector.load %arg12[%c14, %c0_37] : memref<16x32xf32, #tpu.memory_space<vmem>>, vector<2x32xf32>
    tpu.vector_store %arg12[%c14, %c0_37], %169 {strides = array<i32>} : memref<16x32xf32, #tpu.memory_space<vmem>>, vector<2x32xf32>,
    %c0_38 = arith.constant 0 : index
    %c0_39 = arith.constant 0 : index
    %171 = vector.load %arg6[%c0_38, %c0_39] : memref<32x128xf32, #tpu.memory_space<vmem>>, vector<32x128xf32>
    %c0_40 = arith.constant 0 : index
    %c0_41 = arith.constant 0 : index
    %172 = vector.load %arg7[%c0_40, %c0_41] : memref<32x128xf32, #tpu.memory_space<vmem>>, vector<32x128xf32>
    %c0_42 = arith.constant 0 : index
    %c0_43 = arith.constant 0 : index
    %173 = vector.load %arg8[%c0_42, %c0_43] : memref<1x128xf32, #tpu.memory_space<vmem>>, vector<1x128xf32>
    %c0_44 = arith.constant 0 : index
    %c0_45 = arith.constant 0 : index
    %174 = vector.load %arg12[%c0_44, %c0_45] : memref<16x32xf32, #tpu.memory_space<vmem>>, vector<16x32xf32>
    %cst_46 = arith.constant dense<0.000000e+00> : vector<16x128xf32>
    %175 = tpu.matmul %174, %171, %cst_46 {dimension_numbers = #tpu.dot_dimension_numbers<[1], [0], [0], [1], [0, 0, 1, 1], [], []>} : vector<16x32xf32>, vector<32x128xf32>, vector<16x128xf32> -> vector<16x128xf32>
    %176 = vector.broadcast %173 : vector<1x128xf32> to vector<16x128xf32>
    %177 = arith.addf %175, %176 : vector<16x128xf32>
    %c1 = arith.constant 1 : index
    %c0_47 = arith.constant 0 : index
    %c0_48 = arith.constant 0 : index
    %178 = vector.load %arg1[%c1, %c0_47, %c0_48] : memref<2x2x32xf32, #tpu.memory_space<vmem>>, vector<1x2x32xf32>
    %179 = vector.shape_cast %178 : vector<1x2x32xf32> to vector<2x32xf32>
    %c1_49 = arith.constant 1 : index
    %c0_50 = arith.constant 0 : index
    %c0_51 = arith.constant 0 : index
    %180 = vector.load %arg2[%c1_49, %c0_50, %c0_51] : memref<2x2x32xf32, #tpu.memory_space<vmem>>, vector<1x2x32xf32>
    %181 = vector.shape_cast %180 : vector<1x2x32xf32> to vector<2x32xf32>
    %182 = vector.extract_strided_slice %177 {offsets = [0, 0], sizes = [2, 128], strides = [1, 1]} : vector<16x128xf32> to vector<2x128xf32>
    %cst_52 = arith.constant dense<0.000000e+00> : vector<2x128xf32>
    %183 = tpu.matmul %179, %172, %cst_52 {dimension_numbers = #tpu.dot_dimension_numbers<[1], [0], [0], [1], [0, 0, 1, 1], [], []>} : vector<2x32xf32>, vector<32x128xf32>, vector<2x128xf32> -> vector<2x128xf32>
    %184 = arith.addf %182, %183 : vector<2x128xf32>
    %185 = vector.extract_strided_slice %184 {offsets = [0, 0], sizes = [2, 96], strides = [1, 1]} : vector<2x128xf32> to vector<2x96xf32>
    %186 = arith.negf %185 : vector<2x96xf32>
    %187 = math.exp %186 : vector<2x96xf32>
    %cst_53 = arith.constant 1.000000e+00 : f32
    %188 = vector.broadcast %cst_53 : f32 to vector<2x96xf32>
    %189 = arith.addf %188, %187 : vector<2x96xf32>
    %190 = arith.divf %188, %189 : vector<2x96xf32>
    %191 = vector.extract_strided_slice %190 {offsets = [0, 0], sizes = [2, 32], strides = [1, 1]} : vector<2x96xf32> to vector<2x32xf32>
    %192 = vector.extract_strided_slice %190 {offsets = [0, 32], sizes = [2, 32], strides = [1, 1]} : vector<2x96xf32> to vector<2x32xf32>
    %193 = vector.extract_strided_slice %190 {offsets = [0, 64], sizes = [2, 32], strides = [1, 1]} : vector<2x96xf32> to vector<2x32xf32>
    %194 = vector.extract_strided_slice %184 {offsets = [0, 96], sizes = [2, 32], strides = [1, 1]} : vector<2x128xf32> to vector<2x32xf32>
    %195 = math.tanh %194 : vector<2x32xf32>
    %196 = arith.mulf %192, %181 : vector<2x32xf32>
    %197 = arith.mulf %191, %195 : vector<2x32xf32>
    %198 = arith.addf %196, %197 : vector<2x32xf32>
    %199 = math.tanh %198 : vector<2x32xf32>
    %200 = arith.mulf %193, %199 : vector<2x32xf32>
    %c0_54 = arith.constant 0 : index
    %c0_55 = arith.constant 0 : index
    %201 = vector.load %arg13[%c0_54, %c0_55] : memref<2x256xf32, #tpu.memory_space<vmem>>, vector<2x32xf32>
    tpu.vector_store %arg13[%c0_54, %c0_55], %200 {strides = array<i32>} : memref<2x256xf32, #tpu.memory_space<vmem>>, vector<2x32xf32>,
    %202 = vector.extract_strided_slice %177 {offsets = [2, 0], sizes = [2, 128], strides = [1, 1]} : vector<16x128xf32> to vector<2x128xf32>
    %cst_56 = arith.constant dense<0.000000e+00> : vector<2x128xf32>
    %203 = tpu.matmul %200, %172, %cst_56 {dimension_numbers = #tpu.dot_dimension_numbers<[1], [0], [0], [1], [0, 0, 1, 1], [], []>} : vector<2x32xf32>, vector<32x128xf32>, vector<2x128xf32> -> vector<2x128xf32>
    %204 = arith.addf %202, %203 : vector<2x128xf32>
    %205 = vector.extract_strided_slice %204 {offsets = [0, 0], sizes = [2, 96], strides = [1, 1]} : vector<2x128xf32> to vector<2x96xf32>
    %206 = arith.negf %205 : vector<2x96xf32>
    %207 = math.exp %206 : vector<2x96xf32>
    %cst_57 = arith.constant 1.000000e+00 : f32
    %208 = vector.broadcast %cst_57 : f32 to vector<2x96xf32>
    %209 = arith.addf %208, %207 : vector<2x96xf32>
    %210 = arith.divf %208, %209 : vector<2x96xf32>
    %211 = vector.extract_strided_slice %210 {offsets = [0, 0], sizes = [2, 32], strides = [1, 1]} : vector<2x96xf32> to vector<2x32xf32>
    %212 = vector.extract_strided_slice %210 {offsets = [0, 32], sizes = [2, 32], strides = [1, 1]} : vector<2x96xf32> to vector<2x32xf32>
    %213 = vector.extract_strided_slice %210 {offsets = [0, 64], sizes = [2, 32], strides = [1, 1]} : vector<2x96xf32> to vector<2x32xf32>
    %214 = vector.extract_strided_slice %204 {offsets = [0, 96], sizes = [2, 32], strides = [1, 1]} : vector<2x128xf32> to vector<2x32xf32>
    %215 = math.tanh %214 : vector<2x32xf32>
    %216 = arith.mulf %212, %198 : vector<2x32xf32>
    %217 = arith.mulf %211, %215 : vector<2x32xf32>
    %218 = arith.addf %216, %217 : vector<2x32xf32>
    %219 = math.tanh %218 : vector<2x32xf32>
    %220 = arith.mulf %213, %219 : vector<2x32xf32>
    %c0_58 = arith.constant 0 : index
    %c32 = arith.constant 32 : index
    %221 = vector.load %arg13[%c0_58, %c32] : memref<2x256xf32, #tpu.memory_space<vmem>>, vector<2x32xf32>
    tpu.vector_store %arg13[%c0_58, %c32], %220 {strides = array<i32>} : memref<2x256xf32, #tpu.memory_space<vmem>>, vector<2x32xf32>,
    %222 = vector.extract_strided_slice %177 {offsets = [4, 0], sizes = [2, 128], strides = [1, 1]} : vector<16x128xf32> to vector<2x128xf32>
    %cst_59 = arith.constant dense<0.000000e+00> : vector<2x128xf32>
    %223 = tpu.matmul %220, %172, %cst_59 {dimension_numbers = #tpu.dot_dimension_numbers<[1], [0], [0], [1], [0, 0, 1, 1], [], []>} : vector<2x32xf32>, vector<32x128xf32>, vector<2x128xf32> -> vector<2x128xf32>
    %224 = arith.addf %222, %223 : vector<2x128xf32>
    %225 = vector.extract_strided_slice %224 {offsets = [0, 0], sizes = [2, 96], strides = [1, 1]} : vector<2x128xf32> to vector<2x96xf32>
    %226 = arith.negf %225 : vector<2x96xf32>
    %227 = math.exp %226 : vector<2x96xf32>
    %cst_60 = arith.constant 1.000000e+00 : f32
    %228 = vector.broadcast %cst_60 : f32 to vector<2x96xf32>
    %229 = arith.addf %228, %227 : vector<2x96xf32>
    %230 = arith.divf %228, %229 : vector<2x96xf32>
    %231 = vector.extract_strided_slice %230 {offsets = [0, 0], sizes = [2, 32], strides = [1, 1]} : vector<2x96xf32> to vector<2x32xf32>
    %232 = vector.extract_strided_slice %230 {offsets = [0, 32], sizes = [2, 32], strides = [1, 1]} : vector<2x96xf32> to vector<2x32xf32>
    %233 = vector.extract_strided_slice %230 {offsets = [0, 64], sizes = [2, 32], strides = [1, 1]} : vector<2x96xf32> to vector<2x32xf32>
    %234 = vector.extract_strided_slice %224 {offsets = [0, 96], sizes = [2, 32], strides = [1, 1]} : vector<2x128xf32> to vector<2x32xf32>
    %235 = math.tanh %234 : vector<2x32xf32>
    %236 = arith.mulf %232, %218 : vector<2x32xf32>
    %237 = arith.mulf %231, %235 : vector<2x32xf32>
    %238 = arith.addf %236, %237 : vector<2x32xf32>
    %239 = math.tanh %238 : vector<2x32xf32>
    %240 = arith.mulf %233, %239 : vector<2x32xf32>
    %c0_61 = arith.constant 0 : index
    %c64 = arith.constant 64 : index
    %241 = vector.load %arg13[%c0_61, %c64] : memref<2x256xf32, #tpu.memory_space<vmem>>, vector<2x32xf32>
    tpu.vector_store %arg13[%c0_61, %c64], %240 {strides = array<i32>} : memref<2x256xf32, #tpu.memory_space<vmem>>, vector<2x32xf32>,
    %242 = vector.extract_strided_slice %177 {offsets = [6, 0], sizes = [2, 128], strides = [1, 1]} : vector<16x128xf32> to vector<2x128xf32>
    %cst_62 = arith.constant dense<0.000000e+00> : vector<2x128xf32>
    %243 = tpu.matmul %240, %172, %cst_62 {dimension_numbers = #tpu.dot_dimension_numbers<[1], [0], [0], [1], [0, 0, 1, 1], [], []>} : vector<2x32xf32>, vector<32x128xf32>, vector<2x128xf32> -> vector<2x128xf32>
    %244 = arith.addf %242, %243 : vector<2x128xf32>
    %245 = vector.extract_strided_slice %244 {offsets = [0, 0], sizes = [2, 96], strides = [1, 1]} : vector<2x128xf32> to vector<2x96xf32>
    %246 = arith.negf %245 : vector<2x96xf32>
    %247 = math.exp %246 : vector<2x96xf32>
    %cst_63 = arith.constant 1.000000e+00 : f32
    %248 = vector.broadcast %cst_63 : f32 to vector<2x96xf32>
    %249 = arith.addf %248, %247 : vector<2x96xf32>
    %250 = arith.divf %248, %249 : vector<2x96xf32>
    %251 = vector.extract_strided_slice %250 {offsets = [0, 0], sizes = [2, 32], strides = [1, 1]} : vector<2x96xf32> to vector<2x32xf32>
    %252 = vector.extract_strided_slice %250 {offsets = [0, 32], sizes = [2, 32], strides = [1, 1]} : vector<2x96xf32> to vector<2x32xf32>
    %253 = vector.extract_strided_slice %250 {offsets = [0, 64], sizes = [2, 32], strides = [1, 1]} : vector<2x96xf32> to vector<2x32xf32>
    %254 = vector.extract_strided_slice %244 {offsets = [0, 96], sizes = [2, 32], strides = [1, 1]} : vector<2x128xf32> to vector<2x32xf32>
    %255 = math.tanh %254 : vector<2x32xf32>
    %256 = arith.mulf %252, %238 : vector<2x32xf32>
    %257 = arith.mulf %251, %255 : vector<2x32xf32>
    %258 = arith.addf %256, %257 : vector<2x32xf32>
    %259 = math.tanh %258 : vector<2x32xf32>
    %260 = arith.mulf %253, %259 : vector<2x32xf32>
    %c0_64 = arith.constant 0 : index
    %c96 = arith.constant 96 : index
    %261 = vector.load %arg13[%c0_64, %c96] : memref<2x256xf32, #tpu.memory_space<vmem>>, vector<2x32xf32>
    tpu.vector_store %arg13[%c0_64, %c96], %260 {strides = array<i32>} : memref<2x256xf32, #tpu.memory_space<vmem>>, vector<2x32xf32>,
    %262 = vector.extract_strided_slice %177 {offsets = [8, 0], sizes = [2, 128], strides = [1, 1]} : vector<16x128xf32> to vector<2x128xf32>
    %cst_65 = arith.constant dense<0.000000e+00> : vector<2x128xf32>
    %263 = tpu.matmul %260, %172, %cst_65 {dimension_numbers = #tpu.dot_dimension_numbers<[1], [0], [0], [1], [0, 0, 1, 1], [], []>} : vector<2x32xf32>, vector<32x128xf32>, vector<2x128xf32> -> vector<2x128xf32>
    %264 = arith.addf %262, %263 : vector<2x128xf32>
    %265 = vector.extract_strided_slice %264 {offsets = [0, 0], sizes = [2, 96], strides = [1, 1]} : vector<2x128xf32> to vector<2x96xf32>
    %266 = arith.negf %265 : vector<2x96xf32>
    %267 = math.exp %266 : vector<2x96xf32>
    %cst_66 = arith.constant 1.000000e+00 : f32
    %268 = vector.broadcast %cst_66 : f32 to vector<2x96xf32>
    %269 = arith.addf %268, %267 : vector<2x96xf32>
    %270 = arith.divf %268, %269 : vector<2x96xf32>
    %271 = vector.extract_strided_slice %270 {offsets = [0, 0], sizes = [2, 32], strides = [1, 1]} : vector<2x96xf32> to vector<2x32xf32>
    %272 = vector.extract_strided_slice %270 {offsets = [0, 32], sizes = [2, 32], strides = [1, 1]} : vector<2x96xf32> to vector<2x32xf32>
    %273 = vector.extract_strided_slice %270 {offsets = [0, 64], sizes = [2, 32], strides = [1, 1]} : vector<2x96xf32> to vector<2x32xf32>
    %274 = vector.extract_strided_slice %264 {offsets = [0, 96], sizes = [2, 32], strides = [1, 1]} : vector<2x128xf32> to vector<2x32xf32>
    %275 = math.tanh %274 : vector<2x32xf32>
    %276 = arith.mulf %272, %258 : vector<2x32xf32>
    %277 = arith.mulf %271, %275 : vector<2x32xf32>
    %278 = arith.addf %276, %277 : vector<2x32xf32>
    %279 = math.tanh %278 : vector<2x32xf32>
    %280 = arith.mulf %273, %279 : vector<2x32xf32>
    %c0_67 = arith.constant 0 : index
    %c128 = arith.constant 128 : index
    %281 = vector.load %arg13[%c0_67, %c128] : memref<2x256xf32, #tpu.memory_space<vmem>>, vector<2x32xf32>
    tpu.vector_store %arg13[%c0_67, %c128], %280 {strides = array<i32>} : memref<2x256xf32, #tpu.memory_space<vmem>>, vector<2x32xf32>,
    %282 = vector.extract_strided_slice %177 {offsets = [10, 0], sizes = [2, 128], strides = [1, 1]} : vector<16x128xf32> to vector<2x128xf32>
    %cst_68 = arith.constant dense<0.000000e+00> : vector<2x128xf32>
    %283 = tpu.matmul %280, %172, %cst_68 {dimension_numbers = #tpu.dot_dimension_numbers<[1], [0], [0], [1], [0, 0, 1, 1], [], []>} : vector<2x32xf32>, vector<32x128xf32>, vector<2x128xf32> -> vector<2x128xf32>
    %284 = arith.addf %282, %283 : vector<2x128xf32>
    %285 = vector.extract_strided_slice %284 {offsets = [0, 0], sizes = [2, 96], strides = [1, 1]} : vector<2x128xf32> to vector<2x96xf32>
    %286 = arith.negf %285 : vector<2x96xf32>
    %287 = math.exp %286 : vector<2x96xf32>
    %cst_69 = arith.constant 1.000000e+00 : f32
    %288 = vector.broadcast %cst_69 : f32 to vector<2x96xf32>
    %289 = arith.addf %288, %287 : vector<2x96xf32>
    %290 = arith.divf %288, %289 : vector<2x96xf32>
    %291 = vector.extract_strided_slice %290 {offsets = [0, 0], sizes = [2, 32], strides = [1, 1]} : vector<2x96xf32> to vector<2x32xf32>
    %292 = vector.extract_strided_slice %290 {offsets = [0, 32], sizes = [2, 32], strides = [1, 1]} : vector<2x96xf32> to vector<2x32xf32>
    %293 = vector.extract_strided_slice %290 {offsets = [0, 64], sizes = [2, 32], strides = [1, 1]} : vector<2x96xf32> to vector<2x32xf32>
    %294 = vector.extract_strided_slice %284 {offsets = [0, 96], sizes = [2, 32], strides = [1, 1]} : vector<2x128xf32> to vector<2x32xf32>
    %295 = math.tanh %294 : vector<2x32xf32>
    %296 = arith.mulf %292, %278 : vector<2x32xf32>
    %297 = arith.mulf %291, %295 : vector<2x32xf32>
    %298 = arith.addf %296, %297 : vector<2x32xf32>
    %299 = math.tanh %298 : vector<2x32xf32>
    %300 = arith.mulf %293, %299 : vector<2x32xf32>
    %c0_70 = arith.constant 0 : index
    %c160 = arith.constant 160 : index
    %301 = vector.load %arg13[%c0_70, %c160] : memref<2x256xf32, #tpu.memory_space<vmem>>, vector<2x32xf32>
    tpu.vector_store %arg13[%c0_70, %c160], %300 {strides = array<i32>} : memref<2x256xf32, #tpu.memory_space<vmem>>, vector<2x32xf32>,
    %302 = vector.extract_strided_slice %177 {offsets = [12, 0], sizes = [2, 128], strides = [1, 1]} : vector<16x128xf32> to vector<2x128xf32>
    %cst_71 = arith.constant dense<0.000000e+00> : vector<2x128xf32>
    %303 = tpu.matmul %300, %172, %cst_71 {dimension_numbers = #tpu.dot_dimension_numbers<[1], [0], [0], [1], [0, 0, 1, 1], [], []>} : vector<2x32xf32>, vector<32x128xf32>, vector<2x128xf32> -> vector<2x128xf32>
    %304 = arith.addf %302, %303 : vector<2x128xf32>
    %305 = vector.extract_strided_slice %304 {offsets = [0, 0], sizes = [2, 96], strides = [1, 1]} : vector<2x128xf32> to vector<2x96xf32>
    %306 = arith.negf %305 : vector<2x96xf32>
    %307 = math.exp %306 : vector<2x96xf32>
    %cst_72 = arith.constant 1.000000e+00 : f32
    %308 = vector.broadcast %cst_72 : f32 to vector<2x96xf32>
    %309 = arith.addf %308, %307 : vector<2x96xf32>
    %310 = arith.divf %308, %309 : vector<2x96xf32>
    %311 = vector.extract_strided_slice %310 {offsets = [0, 0], sizes = [2, 32], strides = [1, 1]} : vector<2x96xf32> to vector<2x32xf32>
    %312 = vector.extract_strided_slice %310 {offsets = [0, 32], sizes = [2, 32], strides = [1, 1]} : vector<2x96xf32> to vector<2x32xf32>
    %313 = vector.extract_strided_slice %310 {offsets = [0, 64], sizes = [2, 32], strides = [1, 1]} : vector<2x96xf32> to vector<2x32xf32>
    %314 = vector.extract_strided_slice %304 {offsets = [0, 96], sizes = [2, 32], strides = [1, 1]} : vector<2x128xf32> to vector<2x32xf32>
    %315 = math.tanh %314 : vector<2x32xf32>
    %316 = arith.mulf %312, %298 : vector<2x32xf32>
    %317 = arith.mulf %311, %315 : vector<2x32xf32>
    %318 = arith.addf %316, %317 : vector<2x32xf32>
    %319 = math.tanh %318 : vector<2x32xf32>
    %320 = arith.mulf %313, %319 : vector<2x32xf32>
    %c0_73 = arith.constant 0 : index
    %c192 = arith.constant 192 : index
    %321 = vector.load %arg13[%c0_73, %c192] : memref<2x256xf32, #tpu.memory_space<vmem>>, vector<2x32xf32>
    tpu.vector_store %arg13[%c0_73, %c192], %320 {strides = array<i32>} : memref<2x256xf32, #tpu.memory_space<vmem>>, vector<2x32xf32>,
    %322 = vector.extract_strided_slice %177 {offsets = [14, 0], sizes = [2, 128], strides = [1, 1]} : vector<16x128xf32> to vector<2x128xf32>
    %cst_74 = arith.constant dense<0.000000e+00> : vector<2x128xf32>
    %323 = tpu.matmul %320, %172, %cst_74 {dimension_numbers = #tpu.dot_dimension_numbers<[1], [0], [0], [1], [0, 0, 1, 1], [], []>} : vector<2x32xf32>, vector<32x128xf32>, vector<2x128xf32> -> vector<2x128xf32>
    %324 = arith.addf %322, %323 : vector<2x128xf32>
    %325 = vector.extract_strided_slice %324 {offsets = [0, 0], sizes = [2, 96], strides = [1, 1]} : vector<2x128xf32> to vector<2x96xf32>
    %326 = arith.negf %325 : vector<2x96xf32>
    %327 = math.exp %326 : vector<2x96xf32>
    %cst_75 = arith.constant 1.000000e+00 : f32
    %328 = vector.broadcast %cst_75 : f32 to vector<2x96xf32>
    %329 = arith.addf %328, %327 : vector<2x96xf32>
    %330 = arith.divf %328, %329 : vector<2x96xf32>
    %331 = vector.extract_strided_slice %330 {offsets = [0, 0], sizes = [2, 32], strides = [1, 1]} : vector<2x96xf32> to vector<2x32xf32>
    %332 = vector.extract_strided_slice %330 {offsets = [0, 32], sizes = [2, 32], strides = [1, 1]} : vector<2x96xf32> to vector<2x32xf32>
    %333 = vector.extract_strided_slice %330 {offsets = [0, 64], sizes = [2, 32], strides = [1, 1]} : vector<2x96xf32> to vector<2x32xf32>
    %334 = vector.extract_strided_slice %324 {offsets = [0, 96], sizes = [2, 32], strides = [1, 1]} : vector<2x128xf32> to vector<2x32xf32>
    %335 = math.tanh %334 : vector<2x32xf32>
    %336 = arith.mulf %332, %318 : vector<2x32xf32>
    %337 = arith.mulf %331, %335 : vector<2x32xf32>
    %338 = arith.addf %336, %337 : vector<2x32xf32>
    %339 = math.tanh %338 : vector<2x32xf32>
    %340 = arith.mulf %333, %339 : vector<2x32xf32>
    %c0_76 = arith.constant 0 : index
    %c224 = arith.constant 224 : index
    %341 = vector.load %arg13[%c0_76, %c224] : memref<2x256xf32, #tpu.memory_space<vmem>>, vector<2x32xf32>
    tpu.vector_store %arg13[%c0_76, %c224], %340 {strides = array<i32>} : memref<2x256xf32, #tpu.memory_space<vmem>>, vector<2x32xf32>,
    %c0_77 = arith.constant 0 : index
    %c0_78 = arith.constant 0 : index
    %342 = vector.load %arg13[%c0_77, %c0_78] : memref<2x256xf32, #tpu.memory_space<vmem>>, vector<2x256xf32>
    %c0_79 = arith.constant 0 : index
    %c0_80 = arith.constant 0 : index
    %343 = vector.load %arg9[%c0_79, %c0_80] : memref<256x128xf32, #tpu.memory_space<vmem>>, vector<256x128xf32>
    %cst_81 = arith.constant dense<0.000000e+00> : vector<2x128xf32>
    %344 = tpu.matmul %342, %343, %cst_81 {dimension_numbers = #tpu.dot_dimension_numbers<[1], [0], [0], [1], [0, 0, 1, 1], [], []>} : vector<2x256xf32>, vector<256x128xf32>, vector<2x128xf32> -> vector<2x128xf32>
    %c0_82 = arith.constant 0 : index
    %c0_83 = arith.constant 0 : index
    %345 = vector.load %arg10[%c0_82, %c0_83] : memref<1x128xf32, #tpu.memory_space<vmem>>, vector<1x128xf32>
    %346 = vector.broadcast %345 : vector<1x128xf32> to vector<2x128xf32>
    %347 = arith.addf %344, %346 : vector<2x128xf32>
    %c0_84 = arith.constant 0 : index
    %c0_85 = arith.constant 0 : index
    %348 = vector.load %arg11[%c0_84, %c0_85] : memref<2x128xf32, #tpu.memory_space<vmem>>, vector<2x128xf32>
    tpu.vector_store %arg11[%c0_84, %c0_85], %347 {strides = array<i32>} : memref<2x128xf32, #tpu.memory_space<vmem>>, vector<2x128xf32>,
    return
  }
}

</mosaic_0001>

<llo_original>
// kernel: tpu_custom_call.1
$region0: #{tpu_custom_call.1}
  #allocation0 [shape = 'u32[]', space=smem, size = 0x4, offset = 0x4, fixed_abs, tag = 'smem constant byte address 0x4 - core index']
  #allocation1 [shape = 'u32[144,128]{1,0:T(1,128)}', space=vmem, size = 0x12000, scoped, tag = 'internal scratch']
  #allocation2 [shape = 'f32[16,32]{1,0:T(8,128)}', space=vmem, size = 0x2000, scoped, tag = 'scratch operand']
  #allocation3 [shape = 'f32[2,256]{1,0:T(2,128)}', space=vmem, size = 0x800, scoped, tag = 'scratch operand']
  %s0 = inlined_call_operand.hbm [shape: f32[16,16], index: 0, kind: input, shape index: {}]
  %s1 = inlined_call_operand.hbm [shape: f32[2,2,32], index: 1, kind: input, shape index: {}]
  %s2 = inlined_call_operand.hbm [shape: f32[2,2,32], index: 2, kind: input, shape index: {}]
  %s3 = inlined_call_operand.hbm [shape: f32[16,128], index: 3, kind: input, shape index: {}]
  %s4 = inlined_call_operand.hbm [shape: f32[32,128], index: 4, kind: input, shape index: {}]
  %s5 = inlined_call_operand.vmem [shape: f32[1,128], index: 5, kind: input, shape index: {}]
  %s6 = inlined_call_operand.hbm [shape: f32[32,128], index: 6, kind: input, shape index: {}]
  %s7 = inlined_call_operand.hbm [shape: f32[32,128], index: 7, kind: input, shape index: {}]
  %s8 = inlined_call_operand.vmem [shape: f32[1,128], index: 8, kind: input, shape index: {}]
  %s9 = inlined_call_operand.hbm [shape: f32[256,128], index: 9, kind: input, shape index: {}]
  %s10 = inlined_call_operand.vmem [shape: f32[1,128], index: 10, kind: input, shape index: {}]
  %s11 = inlined_call_operand.hbm [shape: f32[2,128], index: 11, kind: output, shape index: {}]
  %s12 = sld [smem:[#allocation0]]
  $region86: #{tpu_custom_call.1} parent=0
    _
  %s14 = ssub.s32 1, %s12
  %s15 = scalar_select 0, %s14, %s12
  $region1: #{tpu_custom_call.1} parent=0
    #allocation4 [shape = 'u8[8192]{0}', space=vmem, size = 0x2000, scoped, tag = 'input window, operand 0, single buffered']
    #allocation5 [shape = 's32[1]{0}', space=sflag, size = 0x4, scoped, tag = 'scoped memory for tpu_custom_call.1']
    #allocation6 [shape = 's32[1]{0}', space=sflag, size = 0x4, scoped, tag = 'scoped memory for tpu_custom_call.1']
    #allocation7 [shape = 'u8[2048]{0}', space=vmem, size = 0x800, scoped, tag = 'input window, operand 1, single buffered']
    #allocation8 [shape = 's32[1]{0}', space=sflag, size = 0x4, scoped, tag = 'scoped memory for tpu_custom_call.1']
    #allocation9 [shape = 'u8[2048]{0}', space=vmem, size = 0x800, scoped, tag = 'input window, operand 2, single buffered']
    #allocation10 [shape = 'u8[8192]{0}', space=vmem, size = 0x2000, scoped, tag = 'input window, operand 3, single buffered']
    #allocation11 [shape = 's32[1]{0}', space=sflag, size = 0x4, scoped, tag = 'scoped memory for tpu_custom_call.1']
    #allocation12 [shape = 'u8[16384]{0}', space=vmem, size = 0x4000, scoped, tag = 'input window, operand 4, single buffered']
    #allocation13 [shape = 'u8[16384]{0}', space=vmem, size = 0x4000, scoped, tag = 'input window, operand 6, single buffered']
    #allocation14 [shape = 's32[1]{0}', space=sflag, size = 0x4, scoped, tag = 'scoped memory for tpu_custom_call.1']
    #allocation15 [shape = 'u8[16384]{0}', space=vmem, size = 0x4000, scoped, tag = 'input window, operand 7, single buffered']
    #allocation16 [shape = 'u8[131072]{0}', space=vmem, size = 0x20000, scoped, tag = 'input window, operand 9, single buffered']
    #allocation17 [shape = 's32[1]{0}', space=sflag, size = 0x4, scoped, tag = 'scoped memory for tpu_custom_call.1']
    #allocation18 [shape = 'u8[1024]{0}', space=vmem, size = 0x400, scoped, tag = 'output window, operand 0, single buffered']
    %16 = vsyncpa [#allocation5], 0
    %17 = vsyncpa [#allocation8], 0
    %18 = vsyncpa [#allocation11], 0
    %19 = vsyncpa [#allocation14], 0
    %20 = vsyncpa [#allocation17], 0
    %21 = vsyncpa [#allocation6], 0
    // Predicated region
    $region2: #{tpu_custom_call.1} parent=1 // pred_check
      _
    $region3: #{tpu_custom_call.1} parent=1 // pred_check_branch
      %23 = sbr.rel (0) target = $region5
    $region4: #{tpu_custom_call.1} parent=1 // pred_region
      %s25 = ssub.s32 256, 256
      %26 = vsyncadd [#allocation5], %s25
      %s27 = sshll.u32 [#allocation4], 4
      %s28 = int_to_ptr.vmem [resolvable:$true] %s27
      %33 = dma.hbm_to_vmem [thread:$0]  %s0, 256, %s28, [#allocation5], 128, 128, 8
    $region5: #{tpu_custom_call.1} parent=1 // pred_fallthru
      _
    // Predicated region
    $region6: #{tpu_custom_call.1} parent=1 // pred_check
      _
    $region7: #{tpu_custom_call.1} parent=1 // pred_check_branch
      %35 = sbr.rel (0) target = $region9
    $region8: #{tpu_custom_call.1} parent=1 // pred_region
      %s37 = ssub.s32 64, 64
      %38 = vsyncadd [#allocation8], %s37
      %s39 = sshll.u32 [#allocation7], 4
      %s40 = int_to_ptr.vmem [resolvable:$true] %s39
      %45 = dma.hbm_to_vmem [thread:$0]  %s1, 64, %s40, [#allocation8], 32, 32, 2
    $region9: #{tpu_custom_call.1} parent=1 // pred_fallthru
      _
    // Predicated region
    $region10: #{tpu_custom_call.1} parent=1 // pred_check
      _
    $region11: #{tpu_custom_call.1} parent=1 // pred_check_branch
      %47 = sbr.rel (0) target = $region13
    $region12: #{tpu_custom_call.1} parent=1 // pred_region
      %s49 = ssub.s32 64, 64
      %50 = vsyncadd [#allocation8], %s49
      %s51 = sshll.u32 [#allocation9], 4
      %s52 = int_to_ptr.vmem [resolvable:$true] %s51
      %57 = dma.hbm_to_vmem [thread:$0]  %s2, 64, %s52, [#allocation8], 32, 32, 2
    $region13: #{tpu_custom_call.1} parent=1 // pred_fallthru
      _
    // Predicated region
    $region14: #{tpu_custom_call.1} parent=1 // pred_check
      _
    $region15: #{tpu_custom_call.1} parent=1 // pred_check_branch
      %59 = sbr.rel (0) target = $region17
    $region16: #{tpu_custom_call.1} parent=1 // pred_region
      %s61 = ssub.s32 256, 256
      %62 = vsyncadd [#allocation11], %s61
      %s63 = sshll.u32 [#allocation10], 4
      %s64 = int_to_ptr.vmem [resolvable:$true] %s63
      %69 = dma.hbm_to_vmem [thread:$0]  %s3, 256, %s64, [#allocation11], 128, 128, 8
    $region17: #{tpu_custom_call.1} parent=1 // pred_fallthru
      _
    // Predicated region
    $region18: #{tpu_custom_call.1} parent=1 // pred_check
      _
    $region19: #{tpu_custom_call.1} parent=1 // pred_check_branch
      %71 = sbr.rel (0) target = $region21
    $region20: #{tpu_custom_call.1} parent=1 // pred_region
      %s73 = ssub.s32 512, 512
      %74 = vsyncadd [#allocation11], %s73
      %s75 = sshll.u32 [#allocation12], 4
      %s76 = int_to_ptr.vmem [resolvable:$true] %s75
      %81 = dma.hbm_to_vmem [thread:$0]  %s4, 512, %s76, [#allocation11], 128, 128, 8
    $region21: #{tpu_custom_call.1} parent=1 // pred_fallthru
      _
    // Predicated region
    $region22: #{tpu_custom_call.1} parent=1 // pred_check
      _
    $region23: #{tpu_custom_call.1} parent=1 // pred_check_branch
      %83 = sbr.rel (0) target = $region25
    $region24: #{tpu_custom_call.1} parent=1 // pred_region
      _
    $region25: #{tpu_custom_call.1} parent=1 // pred_fallthru
      _
    // Predicated region
    $region26: #{tpu_custom_call.1} parent=1 // pred_check
      _
    $region27: #{tpu_custom_call.1} parent=1 // pred_check_branch
      %85 = sbr.rel (0) target = $region29
    $region28: #{tpu_custom_call.1} parent=1 // pred_region
      %s87 = ssub.s32 512, 512
      %88 = vsyncadd [#allocation14], %s87
      %s89 = sshll.u32 [#allocation13], 4
      %s90 = int_to_ptr.vmem [resolvable:$true] %s89
      %95 = dma.hbm_to_vmem [thread:$0]  %s6, 512, %s90, [#allocation14], 128, 128, 8
    $region29: #{tpu_custom_call.1} parent=1 // pred_fallthru
      _
    // Predicated region
    $region30: #{tpu_custom_call.1} parent=1 // pred_check
      _
    $region31: #{tpu_custom_call.1} parent=1 // pred_check_branch
      %97 = sbr.rel (0) target = $region33
    $region32: #{tpu_custom_call.1} parent=1 // pred_region
      %s99 = ssub.s32 512, 512
      %100 = vsyncadd [#allocation14], %s99
      %s101 = sshll.u32 [#allocation15], 4
      %s102 = int_to_ptr.vmem [resolvable:$true] %s101
      %107 = dma.hbm_to_vmem [thread:$0]  %s7, 512, %s102, [#allocation14], 128, 128, 8
    $region33: #{tpu_custom_call.1} parent=1 // pred_fallthru
      _
    // Predicated region
    $region34: #{tpu_custom_call.1} parent=1 // pred_check
      _
    $region35: #{tpu_custom_call.1} parent=1 // pred_check_branch
      %109 = sbr.rel (0) target = $region37
    $region36: #{tpu_custom_call.1} parent=1 // pred_region
      _
    $region37: #{tpu_custom_call.1} parent=1 // pred_fallthru
      _
    // Predicated region
    $region38: #{tpu_custom_call.1} parent=1 // pred_check
      _
    $region39: #{tpu_custom_call.1} parent=1 // pred_check_branch
      %111 = sbr.rel (0) target = $region41
    $region40: #{tpu_custom_call.1} parent=1 // pred_region
      %s113 = ssub.s32 4096, 4096
      %114 = vsyncadd [#allocation17], %s113
      %s115 = sshll.u32 [#allocation16], 4
      %s116 = int_to_ptr.vmem [resolvable:$true] %s115
      %121 = dma.hbm_to_vmem [thread:$0]  %s9, 4096, %s116, [#allocation17], 128, 128, 8
    $region41: #{tpu_custom_call.1} parent=1 // pred_fallthru
      _
    // Predicated region
    $region42: #{tpu_custom_call.1} parent=1 // pred_check
      _
    $region43: #{tpu_custom_call.1} parent=1 // pred_check_branch
      %123 = sbr.rel (0) target = $region45
    $region44: #{tpu_custom_call.1} parent=1 // pred_region
      _
    $region45: #{tpu_custom_call.1} parent=1 // pred_fallthru
      _
    // Predicated region
    $region46: #{tpu_custom_call.1} parent=1 // pred_check
      _
    $region47: #{tpu_custom_call.1} parent=1 // pred_check_branch
      %125 = sbr.rel (0) target = $region49
    $region48: #{tpu_custom_call.1} parent=1 // pred_region
      %126 = dma.done [#allocation5], 256
    $region49: #{tpu_custom_call.1} parent=1 // pred_fallthru
      _
    // Predicated region
    $region50: #{tpu_custom_call.1} parent=1 // pred_check
      _
    $region51: #{tpu_custom_call.1} parent=1 // pred_check_branch
      %128 = sbr.rel (0) target = $region53
    $region52: #{tpu_custom_call.1} parent=1 // pred_region
      %129 = dma.done [#allocation8], 64
    $region53: #{tpu_custom_call.1} parent=1 // pred_fallthru
      _
    // Predicated region
    $region54: #{tpu_custom_call.1} parent=1 // pred_check
      _
    $region55: #{tpu_custom_call.1} parent=1 // pred_check_branch
      %131 = sbr.rel (0) target = $region57
    $region56: #{tpu_custom_call.1} parent=1 // pred_region
      %132 = dma.done [#allocation8], 64
    $region57: #{tpu_custom_call.1} parent=1 // pred_fallthru
      _
    // Predicated region
    $region58: #{tpu_custom_call.1} parent=1 // pred_check
      _
    $region59: #{tpu_custom_call.1} parent=1 // pred_check_branch
      %134 = sbr.rel (0) target = $region61
    $region60: #{tpu_custom_call.1} parent=1 // pred_region
      %135 = dma.done [#allocation11], 256
    $region61: #{tpu_custom_call.1} parent=1 // pred_fallthru
      _
    // Predicated region
    $region62: #{tpu_custom_call.1} parent=1 // pred_check
      _
    $region63: #{tpu_custom_call.1} parent=1 // pred_check_branch
      %137 = sbr.rel (0) target = $region65
    $region64: #{tpu_custom_call.1} parent=1 // pred_region
      %138 = dma.done [#allocation11], 512
    $region65: #{tpu_custom_call.1} parent=1 // pred_fallthru
      _
    // Predicated region
    $region66: #{tpu_custom_call.1} parent=1 // pred_check
      _
    $region67: #{tpu_custom_call.1} parent=1 // pred_check_branch
      %140 = sbr.rel (0) target = $region69
    $region68: #{tpu_custom_call.1} parent=1 // pred_region
      %141 = dma.done [#allocation14], 512
    $region69: #{tpu_custom_call.1} parent=1 // pred_fallthru
      _
    // Predicated region
    $region70: #{tpu_custom_call.1} parent=1 // pred_check
      _
    $region71: #{tpu_custom_call.1} parent=1 // pred_check_branch
      %143 = sbr.rel (0) target = $region73
    $region72: #{tpu_custom_call.1} parent=1 // pred_region
      %144 = dma.done [#allocation14], 512
    $region73: #{tpu_custom_call.1} parent=1 // pred_fallthru
      _
    // Predicated region
    $region74: #{tpu_custom_call.1} parent=1 // pred_check
      _
    $region75: #{tpu_custom_call.1} parent=1 // pred_check_branch
      %146 = sbr.rel (0) target = $region77
    $region76: #{tpu_custom_call.1} parent=1 // pred_region
      %147 = dma.done [#allocation17], 4096
    $region77: #{tpu_custom_call.1} parent=1 // pred_fallthru
      _
    %v148 = vld [vmem:[#allocation10] sm:$0xff]
    %v149 = vld [vmem:[#allocation10 + $0x8] sm:$0xff]
    %v150 = vld [vmem:[#allocation12] sm:$0xff]
    %v151 = vld [vmem:[#allocation12 + $0x8] sm:$0xff]
    %v152 = vld [vmem:[#allocation12 + $0x10] sm:$0xff]
    %v153 = vld [vmem:[#allocation12 + $0x18] sm:$0xff]
    %v154 = vld [vmem:[%s5] sm:$0x1]
    %v155 = vld [vmem:[#allocation4] sm:$0xff]
    %v156 = vld [vmem:[#allocation4 + $0x8] sm:$0xff]
    %v158 = vlaneseq
    %v159 = vshrl.u32 %v158, 7
    %v160 = vsub.s32 0, %v159
    %v161 = vrot.slane %v154, %v160
    %vm163 = vcmask 130048
    %v165 = vsel %vm163, %v155, 0
    %v168 = vsel %vm163, %v156, 0
    %170 = vmatprep.subr.mxu0 0.0
    %171 = vmatpush1.msra.mxu0 0.0
    %172 = vmatprep.subr.mxu0 0.0
    %173 = vmatpush1.msra.mxu0 0.0
    %174 = vmatprep.subr.mxu0 0.0
    %175 = vmatpush1.msra.mxu0 0.0
    %176 = vmatprep.subr.mxu0 0.0
    %177 = vmatpush1.msra.mxu0 0.0
    %178 = vmatprep.subr.mxu0 0.0
    %179 = vmatpush1.msra.mxu0 0.0
    %180 = vmatprep.subr.mxu0 0.0
    %181 = vmatpush1.msra.mxu0 0.0
    %182 = vmatprep.subr.mxu0 0.0
    %183 = vmatpush1.msra.mxu0 0.0
    %184 = vmatprep.subr.mxu0 0.0
    %185 = vmatpush1.msra.mxu0 0.0
    %186 = vmatprep.subr.mxu0 0.0
    %187 = vmatpush1.msra.mxu0 0.0
    %188 = vmatprep.subr.mxu0 0.0
    %189 = vmatpush1.msra.mxu0 0.0
    %190 = vmatprep.subr.mxu0 0.0
    %191 = vmatpush1.msra.mxu0 0.0
    %192 = vmatprep.subr.mxu0 0.0
    %193 = vmatpush1.msra.mxu0 0.0
    %194 = vmatprep.subr.mxu0 0.0
    %195 = vmatpush1.msra.mxu0 0.0
    %196 = vmatprep.subr.mxu0 0.0
    %197 = vmatpush1.msra.mxu0 0.0
    %198 = vmatprep.subr.mxu0 0.0
    %199 = vmatpush1.msra.mxu0 %v149
    %200 = vmatprep.subr.mxu0 0.0
    %201 = vmatpush1.msra.mxu0 %v148
    %202 = vmatprep.subr.mxu0 0.0
    %203 = vmatpush2.msra.mxu0 0.0
    %204 = vmatprep.subr.mxu0 0.0
    %205 = vmatpush2.msra.mxu0 0.0
    %206 = vmatprep.subr.mxu0 0.0
    %207 = vmatpush2.msra.mxu0 0.0
    %208 = vmatprep.subr.mxu0 0.0
    %209 = vmatpush2.msra.mxu0 0.0
    %210 = vmatprep.subr.mxu0 0.0
    %211 = vmatpush2.msra.mxu0 0.0
    %212 = vmatprep.subr.mxu0 0.0
    %213 = vmatpush2.msra.mxu0 0.0
    %214 = vmatprep.subr.mxu0 0.0
    %215 = vmatpush2.msra.mxu0 0.0
    %216 = vmatprep.subr.mxu0 0.0
    %217 = vmatpush2.msra.mxu0 0.0
    %218 = vmatprep.subr.mxu0 0.0
    %219 = vmatpush2.msra.mxu0 0.0
    %220 = vmatprep.subr.mxu0 0.0
    %221 = vmatpush2.msra.mxu0 0.0
    %222 = vmatprep.subr.mxu0 0.0
    %223 = vmatpush2.msra.mxu0 0.0
    %224 = vmatprep.subr.mxu0 0.0
    %225 = vmatpush2.msra.mxu0 0.0
    %226 = vmatprep.subr.mxu0 0.0
    %227 = vmatpush2.msra.mxu0 0.0
    %228 = vmatprep.subr.mxu0 0.0
    %229 = vmatpush2.msra.mxu0 0.0
    %230 = vmatprep.subr.mxu0 0.0
    %231 = vmatpush2.msra.mxu0 0.0
    %232 = vmatprep.subr.mxu0 0.0
    %233 = vmatpush2.msra.mxu0 0.0
    %234 = vmatprep.mubr.f32.mxu0 0.0
    %235 = vmatmul.mubr.f32.gmra.mxu0 %v165
    %v236 = vpop.f32.mrf.mxu0
    %v237 = vadd.f32 %v161, %v236
    %v238 = vpop.f32.mrf.mxu0
    %239 = vmatprep.mubr.f32.mxu0 0.0
    %240 = vmatmul.mubr.f32.gmra.mxu0 %v168
    %v241 = vpop.f32.mrf.mxu0
    %v242 = vadd.f32 %v161, %v241
    %v243 = vpop.f32.mrf.mxu0
    %244 = vdwg.mxu0
    %v245 = vld [vmem:[#allocation7] sm:$0x3]
    %v246 = vld [vmem:[#allocation9] sm:$0x3]
    %vm247 = vcmask 261120
    %v249 = vsel %vm247, %v245, 0
    %251 = vmatprep.subr.mxu0 0.0
    %252 = vmatpush1.msra.mxu0 0.0
    %253 = vmatprep.subr.mxu0 0.0
    %254 = vmatpush1.msra.mxu0 0.0
    %255 = vmatprep.subr.mxu0 0.0
    %256 = vmatpush1.msra.mxu0 0.0
    %257 = vmatprep.subr.mxu0 0.0
    %258 = vmatpush1.msra.mxu0 0.0
    %259 = vmatprep.subr.mxu0 0.0
    %260 = vmatpush1.msra.mxu0 0.0
    %261 = vmatprep.subr.mxu0 0.0
    %262 = vmatpush1.msra.mxu0 0.0
    %263 = vmatprep.subr.mxu0 0.0
    %264 = vmatpush1.msra.mxu0 0.0
    %265 = vmatprep.subr.mxu0 0.0
    %266 = vmatpush1.msra.mxu0 0.0
    %267 = vmatprep.subr.mxu0 0.0
    %268 = vmatpush1.msra.mxu0 0.0
    %269 = vmatprep.subr.mxu0 0.0
    %270 = vmatpush1.msra.mxu0 0.0
    %271 = vmatprep.subr.mxu0 0.0
    %272 = vmatpush1.msra.mxu0 0.0
    %273 = vmatprep.subr.mxu0 0.0
    %274 = vmatpush1.msra.mxu0 0.0
    %275 = vmatprep.subr.mxu0 0.0
    %276 = vmatpush1.msra.mxu0 %v153
    %277 = vmatprep.subr.mxu0 0.0
    %278 = vmatpush1.msra.mxu0 %v152
    %279 = vmatprep.subr.mxu0 0.0
    %280 = vmatpush1.msra.mxu0 %v151
    %281 = vmatprep.subr.mxu0 0.0
    %282 = vmatpush1.msra.mxu0 %v150
    %283 = vmatprep.subr.mxu0 0.0
    %284 = vmatpush2.msra.mxu0 0.0
    %285 = vmatprep.subr.mxu0 0.0
    %286 = vmatpush2.msra.mxu0 0.0
    %287 = vmatprep.subr.mxu0 0.0
    %288 = vmatpush2.msra.mxu0 0.0
    %289 = vmatprep.subr.mxu0 0.0
    %290 = vmatpush2.msra.mxu0 0.0
    %291 = vmatprep.subr.mxu0 0.0
    %292 = vmatpush2.msra.mxu0 0.0
    %293 = vmatprep.subr.mxu0 0.0
    %294 = vmatpush2.msra.mxu0 0.0
    %295 = vmatprep.subr.mxu0 0.0
    %296 = vmatpush2.msra.mxu0 0.0
    %297 = vmatprep.subr.mxu0 0.0
    %298 = vmatpush2.msra.mxu0 0.0
    %299 = vmatprep.subr.mxu0 0.0
    %300 = vmatpush2.msra.mxu0 0.0
    %301 = vmatprep.subr.mxu0 0.0
    %302 = vmatpush2.msra.mxu0 0.0
    %303 = vmatprep.subr.mxu0 0.0
    %304 = vmatpush2.msra.mxu0 0.0
    %305 = vmatprep.subr.mxu0 0.0
    %306 = vmatpush2.msra.mxu0 0.0
    %307 = vmatprep.subr.mxu0 0.0
    %308 = vmatpush2.msra.mxu0 0.0
    %309 = vmatprep.subr.mxu0 0.0
    %310 = vmatpush2.msra.mxu0 0.0
    %311 = vmatprep.subr.mxu0 0.0
    %312 = vmatpush2.msra.mxu0 0.0
    %313 = vmatprep.subr.mxu0 0.0
    %314 = vmatpush2.msra.mxu0 0.0
    %315 = vmatprep.mubr.f32.mxu0 0.0
    %316 = vmatmul.mubr.f32.gmra.mxu0 %v249
    %v317 = vpop.f32.mrf.mxu0
    %v318 = vadd.f32 0.0, %v317
    %v319 = vpop.f32.mrf.mxu0
    %320 = vdwg.mxu0
    %v321 = vadd.f32 %v237, %v318
    %v322 = vxor.u32 %v321, 2147483648
    %v323 = vmul.f32 %v322, 1.442695
    %v324 = vpow.pop %v323
    %v325 = vadd.f32 %v324, 1.0
    %v326 = vrcp.pop %v325
    %v327 = vmul.f32 1.0, %v326
    %v328 = vtanh.pop %v321
    %330 = vrot.lane.b32.xlu0 %v246, 32
    %v331 = vpop.permute.xlu0 %330
    %v333 = vmul.f32 %v327, %v331
    %335 = vrot.lane.b32.xlu0 %v328, 32
    %v336 = vpop.permute.xlu0 %335
    %v338 = vmul.f32 %v327, %v336
    %340 = vrot.lane.b32.xlu0 %v338, 32
    %v341 = vpop.permute.xlu0 %340
    %v343 = vadd.f32 %v333, %v341
    %v344 = vtanh.pop %v343
    %346 = vrot.lane.b32.xlu0 %v344, 32
    %v347 = vpop.permute.xlu0 %346
    %v349 = vmul.f32 %v327, %v347
    %351 = vrot.lane.b32.xlu0 %v349, 64
    %v352 = vpop.permute.xlu0 %351
    %vm354 = vcmask 254976
    %355 = vst.msk [vmem:[#allocation2] sm:$0x3] %vm354, %v352
    %v356 = vsel %vm247, %v352, 0
    %358 = vmatprep.subr.mxu0 0.0
    %359 = vmatpush1.msra.mxu0 0.0
    %360 = vmatprep.subr.mxu0 0.0
    %361 = vmatpush1.msra.mxu0 0.0
    %362 = vmatprep.subr.mxu0 0.0
    %363 = vmatpush1.msra.mxu0 0.0
    %364 = vmatprep.subr.mxu0 0.0
    %365 = vmatpush1.msra.mxu0 0.0
    %366 = vmatprep.subr.mxu0 0.0
    %367 = vmatpush1.msra.mxu0 0.0
    %368 = vmatprep.subr.mxu0 0.0
    %369 = vmatpush1.msra.mxu0 0.0
    %370 = vmatprep.subr.mxu0 0.0
    %371 = vmatpush1.msra.mxu0 0.0
    %372 = vmatprep.subr.mxu0 0.0
    %373 = vmatpush1.msra.mxu0 0.0
    %374 = vmatprep.subr.mxu0 0.0
    %375 = vmatpush1.msra.mxu0 0.0
    %376 = vmatprep.subr.mxu0 0.0
    %377 = vmatpush1.msra.mxu0 0.0
    %378 = vmatprep.subr.mxu0 0.0
    %379 = vmatpush1.msra.mxu0 0.0
    %380 = vmatprep.subr.mxu0 0.0
    %381 = vmatpush1.msra.mxu0 0.0
    %382 = vmatprep.subr.mxu0 0.0
    %383 = vmatpush1.msra.mxu0 %v153
    %384 = vmatprep.subr.mxu0 0.0
    %385 = vmatpush1.msra.mxu0 %v152
    %386 = vmatprep.subr.mxu0 0.0
    %387 = vmatpush1.msra.mxu0 %v151
    %388 = vmatprep.subr.mxu0 0.0
    %389 = vmatpush1.msra.mxu0 %v150
    %390 = vmatprep.subr.mxu0 0.0
    %391 = vmatpush2.msra.mxu0 0.0
    %392 = vmatprep.subr.mxu0 0.0
    %393 = vmatpush2.msra.mxu0 0.0
    %394 = vmatprep.subr.mxu0 0.0
    %395 = vmatpush2.msra.mxu0 0.0
    %396 = vmatprep.subr.mxu0 0.0
    %397 = vmatpush2.msra.mxu0 0.0
    %398 = vmatprep.subr.mxu0 0.0
    %399 = vmatpush2.msra.mxu0 0.0
    %400 = vmatprep.subr.mxu0 0.0
    %401 = vmatpush2.msra.mxu0 0.0
    %402 = vmatprep.subr.mxu0 0.0
    %403 = vmatpush2.msra.mxu0 0.0
    %404 = vmatprep.subr.mxu0 0.0
    %405 = vmatpush2.msra.mxu0 0.0
    %406 = vmatprep.subr.mxu0 0.0
    %407 = vmatpush2.msra.mxu0 0.0
    %408 = vmatprep.subr.mxu0 0.0
    %409 = vmatpush2.msra.mxu0 0.0
    %410 = vmatprep.subr.mxu0 0.0
    %411 = vmatpush2.msra.mxu0 0.0
    %412 = vmatprep.subr.mxu0 0.0
    %413 = vmatpush2.msra.mxu0 0.0
    %414 = vmatprep.subr.mxu0 0.0
    %415 = vmatpush2.msra.mxu0 0.0
    %416 = vmatprep.subr.mxu0 0.0
    %417 = vmatpush2.msra.mxu0 0.0
    %418 = vmatprep.subr.mxu0 0.0
    %419 = vmatpush2.msra.mxu0 0.0
    %420 = vmatprep.subr.mxu0 0.0
    %421 = vmatpush2.msra.mxu0 0.0
    %422 = vmatprep.mubr.f32.mxu0 0.0
    %423 = vmatmul.mubr.f32.gmra.mxu0 %v356
    %v424 = vpop.f32.mrf.mxu0
    %v425 = vadd.f32 0.0, %v424
    %v426 = vpop.f32.mrf.mxu0
    %427 = vdwg.mxu0
    %v429 = vrot.slane %v425, 6
    %v431 = vadd.f32 %v237, %v429
    %v432 = vxor.u32 %v431, 2147483648
    %v433 = vmul.f32 %v432, 1.442695
    %v434 = vpow.pop %v433
    %v435 = vadd.f32 %v434, 1.0
    %v436 = vrcp.pop %v435
    %v437 = vmul.f32 1.0, %v436
    %v438 = vtanh.pop %v431
    %v440 = vrot.slane %v343, 6
    %v442 = vmul.f32 %v437, %v440
    %444 = vrot.lane.b32.xlu0 %v438, 32
    %v445 = vpop.permute.xlu0 %444
    %v447 = vmul.f32 %v437, %v445
    %449 = vrot.lane.b32.xlu0 %v447, 32
    %v450 = vpop.permute.xlu0 %449
    %v452 = vadd.f32 %v442, %v450
    %v453 = vtanh.pop %v452
    %455 = vrot.lane.b32.xlu0 %v453, 32
    %v456 = vpop.permute.xlu0 %455
    %v458 = vmul.f32 %v437, %v456
    %460 = vrot.lane.b32.xlu0 %v458, 64
    %v461 = vpop.permute.xlu0 %460
    %vm463 = vcmask 257026
    %464 = vst.msk [vmem:[#allocation2] sm:$0xc] %vm463, %v461
    %v465 = vrot.slane %v458, 2
    %466 = vrot.lane.b32.xlu0 %v465, 64
    %v467 = vpop.permute.xlu0 %466
    %v468 = vsel %vm247, %v467, 0
    %470 = vmatprep.subr.mxu0 0.0
    %471 = vmatpush1.msra.mxu0 0.0
    %472 = vmatprep.subr.mxu0 0.0
    %473 = vmatpush1.msra.mxu0 0.0
    %474 = vmatprep.subr.mxu0 0.0
    %475 = vmatpush1.msra.mxu0 0.0
    %476 = vmatprep.subr.mxu0 0.0
    %477 = vmatpush1.msra.mxu0 0.0
    %478 = vmatprep.subr.mxu0 0.0
    %479 = vmatpush1.msra.mxu0 0.0
    %480 = vmatprep.subr.mxu0 0.0
    %481 = vmatpush1.msra.mxu0 0.0
    %482 = vmatprep.subr.mxu0 0.0
    %483 = vmatpush1.msra.mxu0 0.0
    %484 = vmatprep.subr.mxu0 0.0
    %485 = vmatpush1.msra.mxu0 0.0
    %486 = vmatprep.subr.mxu0 0.0
    %487 = vmatpush1.msra.mxu0 0.0
    %488 = vmatprep.subr.mxu0 0.0
    %489 = vmatpush1.msra.mxu0 0.0
    %490 = vmatprep.subr.mxu0 0.0
    %491 = vmatpush1.msra.mxu0 0.0
    %492 = vmatprep.subr.mxu0 0.0
    %493 = vmatpush1.msra.mxu0 0.0
    %494 = vmatprep.subr.mxu0 0.0
    %495 = vmatpush1.msra.mxu0 %v153
    %496 = vmatprep.subr.mxu0 0.0
    %497 = vmatpush1.msra.mxu0 %v152
    %498 = vmatprep.subr.mxu0 0.0
    %499 = vmatpush1.msra.mxu0 %v151
    %500 = vmatprep.subr.mxu0 0.0
    %501 = vmatpush1.msra.mxu0 %v150
    %502 = vmatprep.subr.mxu0 0.0
    %503 = vmatpush2.msra.mxu0 0.0
    %504 = vmatprep.subr.mxu0 0.0
    %505 = vmatpush2.msra.mxu0 0.0
    %506 = vmatprep.subr.mxu0 0.0
    %507 = vmatpush2.msra.mxu0 0.0
    %508 = vmatprep.subr.mxu0 0.0
    %509 = vmatpush2.msra.mxu0 0.0
    %510 = vmatprep.subr.mxu0 0.0
    %511 = vmatpush2.msra.mxu0 0.0
    %512 = vmatprep.subr.mxu0 0.0
    %513 = vmatpush2.msra.mxu0 0.0
    %514 = vmatprep.subr.mxu0 0.0
    %515 = vmatpush2.msra.mxu0 0.0
    %516 = vmatprep.subr.mxu0 0.0
    %517 = vmatpush2.msra.mxu0 0.0
    %518 = vmatprep.subr.mxu0 0.0
    %519 = vmatpush2.msra.mxu0 0.0
    %520 = vmatprep.subr.mxu0 0.0
    %521 = vmatpush2.msra.mxu0 0.0
    %522 = vmatprep.subr.mxu0 0.0
    %523 = vmatpush2.msra.mxu0 0.0
    %524 = vmatprep.subr.mxu0 0.0
    %525 = vmatpush2.msra.mxu0 0.0
    %526 = vmatprep.subr.mxu0 0.0
    %527 = vmatpush2.msra.mxu0 0.0
    %528 = vmatprep.subr.mxu0 0.0
    %529 = vmatpush2.msra.mxu0 0.0
    %530 = vmatprep.subr.mxu0 0.0
    %531 = vmatpush2.msra.mxu0 0.0
    %532 = vmatprep.subr.mxu0 0.0
    %533 = vmatpush2.msra.mxu0 0.0
    %534 = vmatprep.mubr.f32.mxu0 0.0
    %535 = vmatmul.mubr.f32.gmra.mxu0 %v468
    %v536 = vpop.f32.mrf.mxu0
    %v537 = vadd.f32 0.0, %v536
    %v538 = vpop.f32.mrf.mxu0
    %539 = vdwg.mxu0
    %v541 = vrot.slane %v537, 4
    %v543 = vadd.f32 %v237, %v541
    %v544 = vxor.u32 %v543, 2147483648
    %v545 = vmul.f32 %v544, 1.442695
    %v546 = vpow.pop %v545
    %v547 = vadd.f32 %v546, 1.0
    %v548 = vrcp.pop %v547
    %v549 = vmul.f32 1.0, %v548
    %v550 = vtanh.pop %v543
    %v552 = vrot.slane %v452, 6
    %v554 = vmul.f32 %v549, %v552
    %556 = vrot.lane.b32.xlu0 %v550, 32
    %v557 = vpop.permute.xlu0 %556
    %v559 = vmul.f32 %v549, %v557
    %561 = vrot.lane.b32.xlu0 %v559, 32
    %v562 = vpop.permute.xlu0 %561
    %v564 = vadd.f32 %v554, %v562
    %v565 = vtanh.pop %v564
    %567 = vrot.lane.b32.xlu0 %v565, 32
    %v568 = vpop.permute.xlu0 %567
    %v570 = vmul.f32 %v549, %v568
    %572 = vrot.lane.b32.xlu0 %v570, 64
    %v573 = vpop.permute.xlu0 %572
    %vm575 = vcmask 259076
    %576 = vst.msk [vmem:[#allocation2] sm:$0x30] %vm575, %v573
    %v577 = vrot.slane %v570, 4
    %578 = vrot.lane.b32.xlu0 %v577, 64
    %v579 = vpop.permute.xlu0 %578
    %v580 = vsel %vm247, %v579, 0
    %582 = vmatprep.subr.mxu0 0.0
    %583 = vmatpush1.msra.mxu0 0.0
    %584 = vmatprep.subr.mxu0 0.0
    %585 = vmatpush1.msra.mxu0 0.0
    %586 = vmatprep.subr.mxu0 0.0
    %587 = vmatpush1.msra.mxu0 0.0
    %588 = vmatprep.subr.mxu0 0.0
    %589 = vmatpush1.msra.mxu0 0.0
    %590 = vmatprep.subr.mxu0 0.0
    %591 = vmatpush1.msra.mxu0 0.0
    %592 = vmatprep.subr.mxu0 0.0
    %593 = vmatpush1.msra.mxu0 0.0
    %594 = vmatprep.subr.mxu0 0.0
    %595 = vmatpush1.msra.mxu0 0.0
    %596 = vmatprep.subr.mxu0 0.0
    %597 = vmatpush1.msra.mxu0 0.0
    %598 = vmatprep.subr.mxu0 0.0
    %599 = vmatpush1.msra.mxu0 0.0
    %600 = vmatprep.subr.mxu0 0.0
    %601 = vmatpush1.msra.mxu0 0.0
    %602 = vmatprep.subr.mxu0 0.0
    %603 = vmatpush1.msra.mxu0 0.0
    %604 = vmatprep.subr.mxu0 0.0
    %605 = vmatpush1.msra.mxu0 0.0
    %606 = vmatprep.subr.mxu0 0.0
    %607 = vmatpush1.msra.mxu0 %v153
    %608 = vmatprep.subr.mxu0 0.0
    %609 = vmatpush1.msra.mxu0 %v152
    %610 = vmatprep.subr.mxu0 0.0
    %611 = vmatpush1.msra.mxu0 %v151
    %612 = vmatprep.subr.mxu0 0.0
    %613 = vmatpush1.msra.mxu0 %v150
    %614 = vmatprep.subr.mxu0 0.0
    %615 = vmatpush2.msra.mxu0 0.0
    %616 = vmatprep.subr.mxu0 0.0
    %617 = vmatpush2.msra.mxu0 0.0
    %618 = vmatprep.subr.mxu0 0.0
    %619 = vmatpush2.msra.mxu0 0.0
    %620 = vmatprep.subr.mxu0 0.0
    %621 = vmatpush2.msra.mxu0 0.0
    %622 = vmatprep.subr.mxu0 0.0
    %623 = vmatpush2.msra.mxu0 0.0
    %624 = vmatprep.subr.mxu0 0.0
    %625 = vmatpush2.msra.mxu0 0.0
    %626 = vmatprep.subr.mxu0 0.0
    %627 = vmatpush2.msra.mxu0 0.0
    %628 = vmatprep.subr.mxu0 0.0
    %629 = vmatpush2.msra.mxu0 0.0
    %630 = vmatprep.subr.mxu0 0.0
    %631 = vmatpush2.msra.mxu0 0.0
    %632 = vmatprep.subr.mxu0 0.0
    %633 = vmatpush2.msra.mxu0 0.0
    %634 = vmatprep.subr.mxu0 0.0
    %635 = vmatpush2.msra.mxu0 0.0
    %636 = vmatprep.subr.mxu0 0.0
    %637 = vmatpush2.msra.mxu0 0.0
    %638 = vmatprep.subr.mxu0 0.0
    %639 = vmatpush2.msra.mxu0 0.0
    %640 = vmatprep.subr.mxu0 0.0
    %641 = vmatpush2.msra.mxu0 0.0
    %642 = vmatprep.subr.mxu0 0.0
    %643 = vmatpush2.msra.mxu0 0.0
    %644 = vmatprep.subr.mxu0 0.0
    %645 = vmatpush2.msra.mxu0 0.0
    %646 = vmatprep.mubr.f32.mxu0 0.0
    %647 = vmatmul.mubr.f32.gmra.mxu0 %v580
    %v648 = vpop.f32.mrf.mxu0
    %v649 = vadd.f32 0.0, %v648
    %v650 = vpop.f32.mrf.mxu0
    %651 = vdwg.mxu0
    %v653 = vrot.slane %v649, 2
    %v655 = vadd.f32 %v237, %v653
    %v656 = vxor.u32 %v655, 2147483648
    %v657 = vmul.f32 %v656, 1.442695
    %v658 = vpow.pop %v657
    %v659 = vadd.f32 %v658, 1.0
    %v660 = vrcp.pop %v659
    %v661 = vmul.f32 1.0, %v660
    %v662 = vtanh.pop %v655
    %v664 = vrot.slane %v564, 6
    %v666 = vmul.f32 %v661, %v664
    %668 = vrot.lane.b32.xlu0 %v662, 32
    %v669 = vpop.permute.xlu0 %668
    %v671 = vmul.f32 %v661, %v669
    %673 = vrot.lane.b32.xlu0 %v671, 32
    %v674 = vpop.permute.xlu0 %673
    %v676 = vadd.f32 %v666, %v674
    %v677 = vtanh.pop %v676
    %679 = vrot.lane.b32.xlu0 %v677, 32
    %v680 = vpop.permute.xlu0 %679
    %v682 = vmul.f32 %v661, %v680
    %684 = vrot.lane.b32.xlu0 %v682, 64
    %v685 = vpop.permute.xlu0 %684
    %vm687 = vcmask 261126
    %688 = vst.msk [vmem:[#allocation2] sm:$0xc0] %vm687, %v685
    %v689 = vrot.slane %v682, 6
    %690 = vrot.lane.b32.xlu0 %v689, 64
    %v691 = vpop.permute.xlu0 %690
    %v692 = vsel %vm247, %v691, 0
    %694 = vmatprep.subr.mxu0 0.0
    %695 = vmatpush1.msra.mxu0 0.0
    %696 = vmatprep.subr.mxu0 0.0
    %697 = vmatpush1.msra.mxu0 0.0
    %698 = vmatprep.subr.mxu0 0.0
    %699 = vmatpush1.msra.mxu0 0.0
    %700 = vmatprep.subr.mxu0 0.0
    %701 = vmatpush1.msra.mxu0 0.0
    %702 = vmatprep.subr.mxu0 0.0
    %703 = vmatpush1.msra.mxu0 0.0
    %704 = vmatprep.subr.mxu0 0.0
    %705 = vmatpush1.msra.mxu0 0.0
    %706 = vmatprep.subr.mxu0 0.0
    %707 = vmatpush1.msra.mxu0 0.0
    %708 = vmatprep.subr.mxu0 0.0
    %709 = vmatpush1.msra.mxu0 0.0
    %710 = vmatprep.subr.mxu0 0.0
    %711 = vmatpush1.msra.mxu0 0.0
    %712 = vmatprep.subr.mxu0 0.0
    %713 = vmatpush1.msra.mxu0 0.0
    %714 = vmatprep.subr.mxu0 0.0
    %715 = vmatpush1.msra.mxu0 0.0
    %716 = vmatprep.subr.mxu0 0.0
    %717 = vmatpush1.msra.mxu0 0.0
    %718 = vmatprep.subr.mxu0 0.0
    %719 = vmatpush1.msra.mxu0 %v153
    %720 = vmatprep.subr.mxu0 0.0
    %721 = vmatpush1.msra.mxu0 %v152
    %722 = vmatprep.subr.mxu0 0.0
    %723 = vmatpush1.msra.mxu0 %v151
    %724 = vmatprep.subr.mxu0 0.0
    %725 = vmatpush1.msra.mxu0 %v150
    %726 = vmatprep.subr.mxu0 0.0
    %727 = vmatpush2.msra.mxu0 0.0
    %728 = vmatprep.subr.mxu0 0.0
    %729 = vmatpush2.msra.mxu0 0.0
    %730 = vmatprep.subr.mxu0 0.0
    %731 = vmatpush2.msra.mxu0 0.0
    %732 = vmatprep.subr.mxu0 0.0
    %733 = vmatpush2.msra.mxu0 0.0
    %734 = vmatprep.subr.mxu0 0.0
    %735 = vmatpush2.msra.mxu0 0.0
    %736 = vmatprep.subr.mxu0 0.0
    %737 = vmatpush2.msra.mxu0 0.0
    %738 = vmatprep.subr.mxu0 0.0
    %739 = vmatpush2.msra.mxu0 0.0
    %740 = vmatprep.subr.mxu0 0.0
    %741 = vmatpush2.msra.mxu0 0.0
    %742 = vmatprep.subr.mxu0 0.0
    %743 = vmatpush2.msra.mxu0 0.0
    %744 = vmatprep.subr.mxu0 0.0
    %745 = vmatpush2.msra.mxu0 0.0
    %746 = vmatprep.subr.mxu0 0.0
    %747 = vmatpush2.msra.mxu0 0.0
    %748 = vmatprep.subr.mxu0 0.0
    %749 = vmatpush2.msra.mxu0 0.0
    %750 = vmatprep.subr.mxu0 0.0
    %751 = vmatpush2.msra.mxu0 0.0
    %752 = vmatprep.subr.mxu0 0.0
    %753 = vmatpush2.msra.mxu0 0.0
    %754 = vmatprep.subr.mxu0 0.0
    %755 = vmatpush2.msra.mxu0 0.0
    %756 = vmatprep.subr.mxu0 0.0
    %757 = vmatpush2.msra.mxu0 0.0
    %758 = vmatprep.mubr.f32.mxu0 0.0
    %759 = vmatmul.mubr.f32.gmra.mxu0 %v692
    %v760 = vpop.f32.mrf.mxu0
    %v761 = vadd.f32 0.0, %v760
    %v762 = vpop.f32.mrf.mxu0
    %763 = vdwg.mxu0
    %v764 = vadd.f32 %v242, %v761
    %v765 = vxor.u32 %v764, 2147483648
    %v766 = vmul.f32 %v765, 1.442695
    %v767 = vpow.pop %v766
    %v768 = vadd.f32 %v767, 1.0
    %v769 = vrcp.pop %v768
    %v770 = vmul.f32 1.0, %v769
    %v771 = vtanh.pop %v764
    %v773 = vrot.slane %v676, 6
    %v775 = vmul.f32 %v770, %v773
    %777 = vrot.lane.b32.xlu0 %v771, 32
    %v778 = vpop.permute.xlu0 %777
    %v780 = vmul.f32 %v770, %v778
    %782 = vrot.lane.b32.xlu0 %v780, 32
    %v783 = vpop.permute.xlu0 %782
    %v785 = vadd.f32 %v775, %v783
    %v786 = vtanh.pop %v785
    %788 = vrot.lane.b32.xlu0 %v786, 32
    %v789 = vpop.permute.xlu0 %788
    %v791 = vmul.f32 %v770, %v789
    %793 = vrot.lane.b32.xlu0 %v791, 64
    %v794 = vpop.permute.xlu0 %793
    %796 = vst.msk [vmem:[#allocation2 + $0x8] sm:$0x3] %vm354, %v794
    %v797 = vsel %vm247, %v794, 0
    %799 = vmatprep.subr.mxu0 0.0
    %800 = vmatpush1.msra.mxu0 0.0
    %801 = vmatprep.subr.mxu0 0.0
    %802 = vmatpush1.msra.mxu0 0.0
    %803 = vmatprep.subr.mxu0 0.0
    %804 = vmatpush1.msra.mxu0 0.0
    %805 = vmatprep.subr.mxu0 0.0
    %806 = vmatpush1.msra.mxu0 0.0
    %807 = vmatprep.subr.mxu0 0.0
    %808 = vmatpush1.msra.mxu0 0.0
    %809 = vmatprep.subr.mxu0 0.0
    %810 = vmatpush1.msra.mxu0 0.0
    %811 = vmatprep.subr.mxu0 0.0
    %812 = vmatpush1.msra.mxu0 0.0
    %813 = vmatprep.subr.mxu0 0.0
    %814 = vmatpush1.msra.mxu0 0.0
    %815 = vmatprep.subr.mxu0 0.0
    %816 = vmatpush1.msra.mxu0 0.0
    %817 = vmatprep.subr.mxu0 0.0
    %818 = vmatpush1.msra.mxu0 0.0
    %819 = vmatprep.subr.mxu0 0.0
    %820 = vmatpush1.msra.mxu0 0.0
    %821 = vmatprep.subr.mxu0 0.0
    %822 = vmatpush1.msra.mxu0 0.0
    %823 = vmatprep.subr.mxu0 0.0
    %824 = vmatpush1.msra.mxu0 %v153
    %825 = vmatprep.subr.mxu0 0.0
    %826 = vmatpush1.msra.mxu0 %v152
    %827 = vmatprep.subr.mxu0 0.0
    %828 = vmatpush1.msra.mxu0 %v151
    %829 = vmatprep.subr.mxu0 0.0
    %830 = vmatpush1.msra.mxu0 %v150
    %831 = vmatprep.subr.mxu0 0.0
    %832 = vmatpush2.msra.mxu0 0.0
    %833 = vmatprep.subr.mxu0 0.0
    %834 = vmatpush2.msra.mxu0 0.0
    %835 = vmatprep.subr.mxu0 0.0
    %836 = vmatpush2.msra.mxu0 0.0
    %837 = vmatprep.subr.mxu0 0.0
    %838 = vmatpush2.msra.mxu0 0.0
    %839 = vmatprep.subr.mxu0 0.0
    %840 = vmatpush2.msra.mxu0 0.0
    %841 = vmatprep.subr.mxu0 0.0
    %842 = vmatpush2.msra.mxu0 0.0
    %843 = vmatprep.subr.mxu0 0.0
    %844 = vmatpush2.msra.mxu0 0.0
    %845 = vmatprep.subr.mxu0 0.0
    %846 = vmatpush2.msra.mxu0 0.0
    %847 = vmatprep.subr.mxu0 0.0
    %848 = vmatpush2.msra.mxu0 0.0
    %849 = vmatprep.subr.mxu0 0.0
    %850 = vmatpush2.msra.mxu0 0.0
    %851 = vmatprep.subr.mxu0 0.0
    %852 = vmatpush2.msra.mxu0 0.0
    %853 = vmatprep.subr.mxu0 0.0
    %854 = vmatpush2.msra.mxu0 0.0
    %855 = vmatprep.subr.mxu0 0.0
    %856 = vmatpush2.msra.mxu0 0.0
    %857 = vmatprep.subr.mxu0 0.0
    %858 = vmatpush2.msra.mxu0 0.0
    %859 = vmatprep.subr.mxu0 0.0
    %860 = vmatpush2.msra.mxu0 0.0
    %861 = vmatprep.subr.mxu0 0.0
    %862 = vmatpush2.msra.mxu0 0.0
    %863 = vmatprep.mubr.f32.mxu0 0.0
    %864 = vmatmul.mubr.f32.gmra.mxu0 %v797
    %v865 = vpop.f32.mrf.mxu0
    %v866 = vadd.f32 0.0, %v865
    %v867 = vpop.f32.mrf.mxu0
    %868 = vdwg.mxu0
    %v870 = vrot.slane %v866, 6
    %v872 = vadd.f32 %v242, %v870
    %v873 = vxor.u32 %v872, 2147483648
    %v874 = vmul.f32 %v873, 1.442695
    %v875 = vpow.pop %v874
    %v876 = vadd.f32 %v875, 1.0
    %v877 = vrcp.pop %v876
    %v878 = vmul.f32 1.0, %v877
    %v879 = vtanh.pop %v872
    %v881 = vrot.slane %v785, 6
    %v883 = vmul.f32 %v878, %v881
    %885 = vrot.lane.b32.xlu0 %v879, 32
    %v886 = vpop.permute.xlu0 %885
    %v888 = vmul.f32 %v878, %v886
    %890 = vrot.lane.b32.xlu0 %v888, 32
    %v891 = vpop.permute.xlu0 %890
    %v893 = vadd.f32 %v883, %v891
    %v894 = vtanh.pop %v893
    %896 = vrot.lane.b32.xlu0 %v894, 32
    %v897 = vpop.permute.xlu0 %896
    %v899 = vmul.f32 %v878, %v897
    %901 = vrot.lane.b32.xlu0 %v899, 64
    %v902 = vpop.permute.xlu0 %901
    %904 = vst.msk [vmem:[#allocation2 + $0x8] sm:$0xc] %vm463, %v902
    %v905 = vrot.slane %v899, 2
    %906 = vrot.lane.b32.xlu0 %v905, 64
    %v907 = vpop.permute.xlu0 %906
    %v908 = vsel %vm247, %v907, 0
    %910 = vmatprep.subr.mxu0 0.0
    %911 = vmatpush1.msra.mxu0 0.0
    %912 = vmatprep.subr.mxu0 0.0
    %913 = vmatpush1.msra.mxu0 0.0
    %914 = vmatprep.subr.mxu0 0.0
    %915 = vmatpush1.msra.mxu0 0.0
    %916 = vmatprep.subr.mxu0 0.0
    %917 = vmatpush1.msra.mxu0 0.0
    %918 = vmatprep.subr.mxu0 0.0
    %919 = vmatpush1.msra.mxu0 0.0
    %920 = vmatprep.subr.mxu0 0.0
    %921 = vmatpush1.msra.mxu0 0.0
    %922 = vmatprep.subr.mxu0 0.0
    %923 = vmatpush1.msra.mxu0 0.0
    %924 = vmatprep.subr.mxu0 0.0
    %925 = vmatpush1.msra.mxu0 0.0
    %926 = vmatprep.subr.mxu0 0.0
    %927 = vmatpush1.msra.mxu0 0.0
    %928 = vmatprep.subr.mxu0 0.0
    %929 = vmatpush1.msra.mxu0 0.0
    %930 = vmatprep.subr.mxu0 0.0
    %931 = vmatpush1.msra.mxu0 0.0
    %932 = vmatprep.subr.mxu0 0.0
    %933 = vmatpush1.msra.mxu0 0.0
    %934 = vmatprep.subr.mxu0 0.0
    %935 = vmatpush1.msra.mxu0 %v153
    %936 = vmatprep.subr.mxu0 0.0
    %937 = vmatpush1.msra.mxu0 %v152
    %938 = vmatprep.subr.mxu0 0.0
    %939 = vmatpush1.msra.mxu0 %v151
    %940 = vmatprep.subr.mxu0 0.0
    %941 = vmatpush1.msra.mxu0 %v150
    %942 = vmatprep.subr.mxu0 0.0
    %943 = vmatpush2.msra.mxu0 0.0
    %944 = vmatprep.subr.mxu0 0.0
    %945 = vmatpush2.msra.mxu0 0.0
    %946 = vmatprep.subr.mxu0 0.0
    %947 = vmatpush2.msra.mxu0 0.0
    %948 = vmatprep.subr.mxu0 0.0
    %949 = vmatpush2.msra.mxu0 0.0
    %950 = vmatprep.subr.mxu0 0.0
    %951 = vmatpush2.msra.mxu0 0.0
    %952 = vmatprep.subr.mxu0 0.0
    %953 = vmatpush2.msra.mxu0 0.0
    %954 = vmatprep.subr.mxu0 0.0
    %955 = vmatpush2.msra.mxu0 0.0
    %956 = vmatprep.subr.mxu0 0.0
    %957 = vmatpush2.msra.mxu0 0.0
    %958 = vmatprep.subr.mxu0 0.0
    %959 = vmatpush2.msra.mxu0 0.0
    %960 = vmatprep.subr.mxu0 0.0
    %961 = vmatpush2.msra.mxu0 0.0
    %962 = vmatprep.subr.mxu0 0.0
    %963 = vmatpush2.msra.mxu0 0.0
    %964 = vmatprep.subr.mxu0 0.0
    %965 = vmatpush2.msra.mxu0 0.0
    %966 = vmatprep.subr.mxu0 0.0
    %967 = vmatpush2.msra.mxu0 0.0
    %968 = vmatprep.subr.mxu0 0.0
    %969 = vmatpush2.msra.mxu0 0.0
    %970 = vmatprep.subr.mxu0 0.0
    %971 = vmatpush2.msra.mxu0 0.0
    %972 = vmatprep.subr.mxu0 0.0
    %973 = vmatpush2.msra.mxu0 0.0
    %974 = vmatprep.mubr.f32.mxu0 0.0
    %975 = vmatmul.mubr.f32.gmra.mxu0 %v908
    %v976 = vpop.f32.mrf.mxu0
    %v977 = vadd.f32 0.0, %v976
    %v978 = vpop.f32.mrf.mxu0
    %979 = vdwg.mxu0
    %v981 = vrot.slane %v977, 4
    %v983 = vadd.f32 %v242, %v981
    %v984 = vxor.u32 %v983, 2147483648
    %v985 = vmul.f32 %v984, 1.442695
    %v986 = vpow.pop %v985
    %v987 = vadd.f32 %v986, 1.0
    %v988 = vrcp.pop %v987
    %v989 = vmul.f32 1.0, %v988
    %v990 = vtanh.pop %v983
    %v992 = vrot.slane %v893, 6
    %v994 = vmul.f32 %v989, %v992
    %996 = vrot.lane.b32.xlu0 %v990, 32
    %v997 = vpop.permute.xlu0 %996
    %v999 = vmul.f32 %v989, %v997
    %1001 = vrot.lane.b32.xlu0 %v999, 32
    %v1002 = vpop.permute.xlu0 %1001
    %v1004 = vadd.f32 %v994, %v1002
    %v1005 = vtanh.pop %v1004
    %1007 = vrot.lane.b32.xlu0 %v1005, 32
    %v1008 = vpop.permute.xlu0 %1007
    %v1010 = vmul.f32 %v989, %v1008
    %1012 = vrot.lane.b32.xlu0 %v1010, 64
    %v1013 = vpop.permute.xlu0 %1012
    %1015 = vst.msk [vmem:[#allocation2 + $0x8] sm:$0x30] %vm575, %v1013
    %v1016 = vrot.slane %v1010, 4
    %1017 = vrot.lane.b32.xlu0 %v1016, 64
    %v1018 = vpop.permute.xlu0 %1017
    %v1019 = vsel %vm247, %v1018, 0
    %1021 = vmatprep.subr.mxu0 0.0
    %1022 = vmatpush1.msra.mxu0 0.0
    %1023 = vmatprep.subr.mxu0 0.0
    %1024 = vmatpush1.msra.mxu0 0.0
    %1025 = vmatprep.subr.mxu0 0.0
    %1026 = vmatpush1.msra.mxu0 0.0
    %1027 = vmatprep.subr.mxu0 0.0
    %1028 = vmatpush1.msra.mxu0 0.0
    %1029 = vmatprep.subr.mxu0 0.0
    %1030 = vmatpush1.msra.mxu0 0.0
    %1031 = vmatprep.subr.mxu0 0.0
    %1032 = vmatpush1.msra.mxu0 0.0
    %1033 = vmatprep.subr.mxu0 0.0
    %1034 = vmatpush1.msra.mxu0 0.0
    %1035 = vmatprep.subr.mxu0 0.0
    %1036 = vmatpush1.msra.mxu0 0.0
    %1037 = vmatprep.subr.mxu0 0.0
    %1038 = vmatpush1.msra.mxu0 0.0
    %1039 = vmatprep.subr.mxu0 0.0
    %1040 = vmatpush1.msra.mxu0 0.0
    %1041 = vmatprep.subr.mxu0 0.0
    %1042 = vmatpush1.msra.mxu0 0.0
    %1043 = vmatprep.subr.mxu0 0.0
    %1044 = vmatpush1.msra.mxu0 0.0
    %1045 = vmatprep.subr.mxu0 0.0
    %1046 = vmatpush1.msra.mxu0 %v153
    %1047 = vmatprep.subr.mxu0 0.0
    %1048 = vmatpush1.msra.mxu0 %v152
    %1049 = vmatprep.subr.mxu0 0.0
    %1050 = vmatpush1.msra.mxu0 %v151
    %1051 = vmatprep.subr.mxu0 0.0
    %1052 = vmatpush1.msra.mxu0 %v150
    %1053 = vmatprep.subr.mxu0 0.0
    %1054 = vmatpush2.msra.mxu0 0.0
    %1055 = vmatprep.subr.mxu0 0.0
    %1056 = vmatpush2.msra.mxu0 0.0
    %1057 = vmatprep.subr.mxu0 0.0
    %1058 = vmatpush2.msra.mxu0 0.0
    %1059 = vmatprep.subr.mxu0 0.0
    %1060 = vmatpush2.msra.mxu0 0.0
    %1061 = vmatprep.subr.mxu0 0.0
    %1062 = vmatpush2.msra.mxu0 0.0
    %1063 = vmatprep.subr.mxu0 0.0
    %1064 = vmatpush2.msra.mxu0 0.0
    %1065 = vmatprep.subr.mxu0 0.0
    %1066 = vmatpush2.msra.mxu0 0.0
    %1067 = vmatprep.subr.mxu0 0.0
    %1068 = vmatpush2.msra.mxu0 0.0
    %1069 = vmatprep.subr.mxu0 0.0
    %1070 = vmatpush2.msra.mxu0 0.0
    %1071 = vmatprep.subr.mxu0 0.0
    %1072 = vmatpush2.msra.mxu0 0.0
    %1073 = vmatprep.subr.mxu0 0.0
    %1074 = vmatpush2.msra.mxu0 0.0
    %1075 = vmatprep.subr.mxu0 0.0
    %1076 = vmatpush2.msra.mxu0 0.0
    %1077 = vmatprep.subr.mxu0 0.0
    %1078 = vmatpush2.msra.mxu0 0.0
    %1079 = vmatprep.subr.mxu0 0.0
    %1080 = vmatpush2.msra.mxu0 0.0
    %1081 = vmatprep.subr.mxu0 0.0
    %1082 = vmatpush2.msra.mxu0 0.0
    %1083 = vmatprep.subr.mxu0 0.0
    %1084 = vmatpush2.msra.mxu0 0.0
    %1085 = vmatprep.mubr.f32.mxu0 0.0
    %1086 = vmatmul.mubr.f32.gmra.mxu0 %v1019
    %v1087 = vpop.f32.mrf.mxu0
    %v1088 = vadd.f32 0.0, %v1087
    %v1089 = vpop.f32.mrf.mxu0
    %1090 = vdwg.mxu0
    %v1092 = vrot.slane %v1088, 2
    %v1094 = vadd.f32 %v242, %v1092
    %v1095 = vxor.u32 %v1094, 2147483648
    %v1096 = vmul.f32 %v1095, 1.442695
    %v1097 = vpow.pop %v1096
    %v1098 = vadd.f32 %v1097, 1.0
    %v1099 = vrcp.pop %v1098
    %v1100 = vmul.f32 1.0, %v1099
    %v1101 = vtanh.pop %v1094
    %v1103 = vrot.slane %v1004, 6
    %v1105 = vmul.f32 %v1100, %v1103
    %1107 = vrot.lane.b32.xlu0 %v1101, 32
    %v1108 = vpop.permute.xlu0 %1107
    %v1110 = vmul.f32 %v1100, %v1108
    %1112 = vrot.lane.b32.xlu0 %v1110, 32
    %v1113 = vpop.permute.xlu0 %1112
    %v1115 = vadd.f32 %v1105, %v1113
    %v1116 = vtanh.pop %v1115
    %1118 = vrot.lane.b32.xlu0 %v1116, 32
    %v1119 = vpop.permute.xlu0 %1118
    %v1121 = vmul.f32 %v1100, %v1119
    %1123 = vrot.lane.b32.xlu0 %v1121, 64
    %v1124 = vpop.permute.xlu0 %1123
    %1126 = vst.msk [vmem:[#allocation2 + $0x8] sm:$0xc0] %vm687, %v1124
    %v1127 = vld [vmem:[#allocation13] sm:$0xff]
    %v1128 = vld [vmem:[#allocation13 + $0x8] sm:$0xff]
    %v1129 = vld [vmem:[#allocation13 + $0x10] sm:$0xff]
    %v1130 = vld [vmem:[#allocation13 + $0x18] sm:$0xff]
    %v1131 = vld [vmem:[#allocation15] sm:$0xff]
    %v1132 = vld [vmem:[#allocation15 + $0x8] sm:$0xff]
    %v1133 = vld [vmem:[#allocation15 + $0x10] sm:$0xff]
    %v1134 = vld [vmem:[#allocation15 + $0x18] sm:$0xff]
    %v1135 = vld [vmem:[%s8] sm:$0x1]
    %v1136 = vld [vmem:[#allocation2] sm:$0xff]
    %v1137 = vld [vmem:[#allocation2 + $0x8] sm:$0xff]
    %v1139 = vlaneseq
    %v1140 = vshrl.u32 %v1139, 7
    %v1141 = vsub.s32 0, %v1140
    %v1142 = vrot.slane %v1135, %v1141
    %v1145 = vsel %vm247, %v1136, 0
    %v1148 = vsel %vm247, %v1137, 0
    %1150 = vmatprep.subr.mxu0 0.0
    %1151 = vmatpush1.msra.mxu0 0.0
    %1152 = vmatprep.subr.mxu0 0.0
    %1153 = vmatpush1.msra.mxu0 0.0
    %1154 = vmatprep.subr.mxu0 0.0
    %1155 = vmatpush1.msra.mxu0 0.0
    %1156 = vmatprep.subr.mxu0 0.0
    %1157 = vmatpush1.msra.mxu0 0.0
    %1158 = vmatprep.subr.mxu0 0.0
    %1159 = vmatpush1.msra.mxu0 0.0
    %1160 = vmatprep.subr.mxu0 0.0
    %1161 = vmatpush1.msra.mxu0 0.0
    %1162 = vmatprep.subr.mxu0 0.0
    %1163 = vmatpush1.msra.mxu0 0.0
    %1164 = vmatprep.subr.mxu0 0.0
    %1165 = vmatpush1.msra.mxu0 0.0
    %1166 = vmatprep.subr.mxu0 0.0
    %1167 = vmatpush1.msra.mxu0 0.0
    %1168 = vmatprep.subr.mxu0 0.0
    %1169 = vmatpush1.msra.mxu0 0.0
    %1170 = vmatprep.subr.mxu0 0.0
    %1171 = vmatpush1.msra.mxu0 0.0
    %1172 = vmatprep.subr.mxu0 0.0
    %1173 = vmatpush1.msra.mxu0 0.0
    %1174 = vmatprep.subr.mxu0 0.0
    %1175 = vmatpush1.msra.mxu0 %v1130
    %1176 = vmatprep.subr.mxu0 0.0
    %1177 = vmatpush1.msra.mxu0 %v1129
    %1178 = vmatprep.subr.mxu0 0.0
    %1179 = vmatpush1.msra.mxu0 %v1128
    %1180 = vmatprep.subr.mxu0 0.0
    %1181 = vmatpush1.msra.mxu0 %v1127
    %1182 = vmatprep.subr.mxu0 0.0
    %1183 = vmatpush2.msra.mxu0 0.0
    %1184 = vmatprep.subr.mxu0 0.0
    %1185 = vmatpush2.msra.mxu0 0.0
    %1186 = vmatprep.subr.mxu0 0.0
    %1187 = vmatpush2.msra.mxu0 0.0
    %1188 = vmatprep.subr.mxu0 0.0
    %1189 = vmatpush2.msra.mxu0 0.0
    %1190 = vmatprep.subr.mxu0 0.0
    %1191 = vmatpush2.msra.mxu0 0.0
    %1192 = vmatprep.subr.mxu0 0.0
    %1193 = vmatpush2.msra.mxu0 0.0
    %1194 = vmatprep.subr.mxu0 0.0
    %1195 = vmatpush2.msra.mxu0 0.0
    %1196 = vmatprep.subr.mxu0 0.0
    %1197 = vmatpush2.msra.mxu0 0.0
    %1198 = vmatprep.subr.mxu0 0.0
    %1199 = vmatpush2.msra.mxu0 0.0
    %1200 = vmatprep.subr.mxu0 0.0
    %1201 = vmatpush2.msra.mxu0 0.0
    %1202 = vmatprep.subr.mxu0 0.0
    %1203 = vmatpush2.msra.mxu0 0.0
    %1204 = vmatprep.subr.mxu0 0.0
    %1205 = vmatpush2.msra.mxu0 0.0
    %1206 = vmatprep.subr.mxu0 0.0
    %1207 = vmatpush2.msra.mxu0 0.0
    %1208 = vmatprep.subr.mxu0 0.0
    %1209 = vmatpush2.msra.mxu0 0.0
    %1210 = vmatprep.subr.mxu0 0.0
    %1211 = vmatpush2.msra.mxu0 0.0
    %1212 = vmatprep.subr.mxu0 0.0
    %1213 = vmatpush2.msra.mxu0 0.0
    %1214 = vmatprep.mubr.f32.mxu0 0.0
    %1215 = vmatmul.mubr.f32.gmra.mxu0 %v1145
    %v1216 = vpop.f32.mrf.mxu0
    %v1217 = vadd.f32 %v1142, %v1216
    %v1218 = vpop.f32.mrf.mxu0
    %1219 = vmatprep.mubr.f32.mxu0 0.0
    %1220 = vmatmul.mubr.f32.gmra.mxu0 %v1148
    %v1221 = vpop.f32.mrf.mxu0
    %v1222 = vadd.f32 %v1142, %v1221
    %v1223 = vpop.f32.mrf.mxu0
    %1224 = vdwg.mxu0
    %s1225 = scalar_lea.vmem [#allocation7], 2
    %v1226 = vld [vmem:[%s1225] sm:$0x3]
    %s1227 = scalar_lea.vmem [#allocation9], 2
    %v1228 = vld [vmem:[%s1227] sm:$0x3]
    %v1230 = vsel %vm247, %v1226, 0
    %1232 = vmatprep.subr.mxu0 0.0
    %1233 = vmatpush1.msra.mxu0 0.0
    %1234 = vmatprep.subr.mxu0 0.0
    %1235 = vmatpush1.msra.mxu0 0.0
    %1236 = vmatprep.subr.mxu0 0.0
    %1237 = vmatpush1.msra.mxu0 0.0
    %1238 = vmatprep.subr.mxu0 0.0
    %1239 = vmatpush1.msra.mxu0 0.0
    %1240 = vmatprep.subr.mxu0 0.0
    %1241 = vmatpush1.msra.mxu0 0.0
    %1242 = vmatprep.subr.mxu0 0.0
    %1243 = vmatpush1.msra.mxu0 0.0
    %1244 = vmatprep.subr.mxu0 0.0
    %1245 = vmatpush1.msra.mxu0 0.0
    %1246 = vmatprep.subr.mxu0 0.0
    %1247 = vmatpush1.msra.mxu0 0.0
    %1248 = vmatprep.subr.mxu0 0.0
    %1249 = vmatpush1.msra.mxu0 0.0
    %1250 = vmatprep.subr.mxu0 0.0
    %1251 = vmatpush1.msra.mxu0 0.0
    %1252 = vmatprep.subr.mxu0 0.0
    %1253 = vmatpush1.msra.mxu0 0.0
    %1254 = vmatprep.subr.mxu0 0.0
    %1255 = vmatpush1.msra.mxu0 0.0
    %1256 = vmatprep.subr.mxu0 0.0
    %1257 = vmatpush1.msra.mxu0 %v1134
    %1258 = vmatprep.subr.mxu0 0.0
    %1259 = vmatpush1.msra.mxu0 %v1133
    %1260 = vmatprep.subr.mxu0 0.0
    %1261 = vmatpush1.msra.mxu0 %v1132
    %1262 = vmatprep.subr.mxu0 0.0
    %1263 = vmatpush1.msra.mxu0 %v1131
    %1264 = vmatprep.subr.mxu0 0.0
    %1265 = vmatpush2.msra.mxu0 0.0
    %1266 = vmatprep.subr.mxu0 0.0
    %1267 = vmatpush2.msra.mxu0 0.0
    %1268 = vmatprep.subr.mxu0 0.0
    %1269 = vmatpush2.msra.mxu0 0.0
    %1270 = vmatprep.subr.mxu0 0.0
    %1271 = vmatpush2.msra.mxu0 0.0
    %1272 = vmatprep.subr.mxu0 0.0
    %1273 = vmatpush2.msra.mxu0 0.0
    %1274 = vmatprep.subr.mxu0 0.0
    %1275 = vmatpush2.msra.mxu0 0.0
    %1276 = vmatprep.subr.mxu0 0.0
    %1277 = vmatpush2.msra.mxu0 0.0
    %1278 = vmatprep.subr.mxu0 0.0
    %1279 = vmatpush2.msra.mxu0 0.0
    %1280 = vmatprep.subr.mxu0 0.0
    %1281 = vmatpush2.msra.mxu0 0.0
    %1282 = vmatprep.subr.mxu0 0.0
    %1283 = vmatpush2.msra.mxu0 0.0
    %1284 = vmatprep.subr.mxu0 0.0
    %1285 = vmatpush2.msra.mxu0 0.0
    %1286 = vmatprep.subr.mxu0 0.0
    %1287 = vmatpush2.msra.mxu0 0.0
    %1288 = vmatprep.subr.mxu0 0.0
    %1289 = vmatpush2.msra.mxu0 0.0
    %1290 = vmatprep.subr.mxu0 0.0
    %1291 = vmatpush2.msra.mxu0 0.0
    %1292 = vmatprep.subr.mxu0 0.0
    %1293 = vmatpush2.msra.mxu0 0.0
    %1294 = vmatprep.subr.mxu0 0.0
    %1295 = vmatpush2.msra.mxu0 0.0
    %1296 = vmatprep.mubr.f32.mxu0 0.0
    %1297 = vmatmul.mubr.f32.gmra.mxu0 %v1230
    %v1298 = vpop.f32.mrf.mxu0
    %v1299 = vadd.f32 0.0, %v1298
    %v1300 = vpop.f32.mrf.mxu0
    %1301 = vdwg.mxu0
    %v1302 = vadd.f32 %v1217, %v1299
    %v1303 = vxor.u32 %v1302, 2147483648
    %v1304 = vmul.f32 %v1303, 1.442695
    %v1305 = vpow.pop %v1304
    %v1306 = vadd.f32 %v1305, 1.0
    %v1307 = vrcp.pop %v1306
    %v1308 = vmul.f32 1.0, %v1307
    %v1309 = vtanh.pop %v1302
    %1311 = vrot.lane.b32.xlu0 %v1228, 32
    %v1312 = vpop.permute.xlu0 %1311
    %v1314 = vmul.f32 %v1308, %v1312
    %1316 = vrot.lane.b32.xlu0 %v1309, 32
    %v1317 = vpop.permute.xlu0 %1316
    %v1319 = vmul.f32 %v1308, %v1317
    %1321 = vrot.lane.b32.xlu0 %v1319, 32
    %v1322 = vpop.permute.xlu0 %1321
    %v1324 = vadd.f32 %v1314, %v1322
    %v1325 = vtanh.pop %v1324
    %1327 = vrot.lane.b32.xlu0 %v1325, 32
    %v1328 = vpop.permute.xlu0 %1327
    %v1330 = vmul.f32 %v1308, %v1328
    %v1333 = vunpack.c.l.s4 1983009808
    %v1334 = vunpack.c.0.s8 %v1333
    %v1335 = vlaneseq
    %v1336 = vshrl.u32 %v1335, 7
    %v1337 = vsub.s32 %v1334, %v1336
    %v1338 = vrot.slane %v1330, %v1337
    %1339 = vrot.lane.b32.xlu0 %v1338, 64
    %v1340 = vpop.permute.xlu0 %1339
    %1342 = vst.msk [vmem:[#allocation3] sm:$0x3] %vm354, %v1340
    %1343 = vrot.lane.b32.xlu0 %v1330, 64
    %v1344 = vpop.permute.xlu0 %1343
    %v1345 = vsel %vm247, %v1344, 0
    %1347 = vmatprep.subr.mxu0 0.0
    %1348 = vmatpush1.msra.mxu0 0.0
    %1349 = vmatprep.subr.mxu0 0.0
    %1350 = vmatpush1.msra.mxu0 0.0
    %1351 = vmatprep.subr.mxu0 0.0
    %1352 = vmatpush1.msra.mxu0 0.0
    %1353 = vmatprep.subr.mxu0 0.0
    %1354 = vmatpush1.msra.mxu0 0.0
    %1355 = vmatprep.subr.mxu0 0.0
    %1356 = vmatpush1.msra.mxu0 0.0
    %1357 = vmatprep.subr.mxu0 0.0
    %1358 = vmatpush1.msra.mxu0 0.0
    %1359 = vmatprep.subr.mxu0 0.0
    %1360 = vmatpush1.msra.mxu0 0.0
    %1361 = vmatprep.subr.mxu0 0.0
    %1362 = vmatpush1.msra.mxu0 0.0
    %1363 = vmatprep.subr.mxu0 0.0
    %1364 = vmatpush1.msra.mxu0 0.0
    %1365 = vmatprep.subr.mxu0 0.0
    %1366 = vmatpush1.msra.mxu0 0.0
    %1367 = vmatprep.subr.mxu0 0.0
    %1368 = vmatpush1.msra.mxu0 0.0
    %1369 = vmatprep.subr.mxu0 0.0
    %1370 = vmatpush1.msra.mxu0 0.0
    %1371 = vmatprep.subr.mxu0 0.0
    %1372 = vmatpush1.msra.mxu0 %v1134
    %1373 = vmatprep.subr.mxu0 0.0
    %1374 = vmatpush1.msra.mxu0 %v1133
    %1375 = vmatprep.subr.mxu0 0.0
    %1376 = vmatpush1.msra.mxu0 %v1132
    %1377 = vmatprep.subr.mxu0 0.0
    %1378 = vmatpush1.msra.mxu0 %v1131
    %1379 = vmatprep.subr.mxu0 0.0
    %1380 = vmatpush2.msra.mxu0 0.0
    %1381 = vmatprep.subr.mxu0 0.0
    %1382 = vmatpush2.msra.mxu0 0.0
    %1383 = vmatprep.subr.mxu0 0.0
    %1384 = vmatpush2.msra.mxu0 0.0
    %1385 = vmatprep.subr.mxu0 0.0
    %1386 = vmatpush2.msra.mxu0 0.0
    %1387 = vmatprep.subr.mxu0 0.0
    %1388 = vmatpush2.msra.mxu0 0.0
    %1389 = vmatprep.subr.mxu0 0.0
    %1390 = vmatpush2.msra.mxu0 0.0
    %1391 = vmatprep.subr.mxu0 0.0
    %1392 = vmatpush2.msra.mxu0 0.0
    %1393 = vmatprep.subr.mxu0 0.0
    %1394 = vmatpush2.msra.mxu0 0.0
    %1395 = vmatprep.subr.mxu0 0.0
    %1396 = vmatpush2.msra.mxu0 0.0
    %1397 = vmatprep.subr.mxu0 0.0
    %1398 = vmatpush2.msra.mxu0 0.0
    %1399 = vmatprep.subr.mxu0 0.0
    %1400 = vmatpush2.msra.mxu0 0.0
    %1401 = vmatprep.subr.mxu0 0.0
    %1402 = vmatpush2.msra.mxu0 0.0
    %1403 = vmatprep.subr.mxu0 0.0
    %1404 = vmatpush2.msra.mxu0 0.0
    %1405 = vmatprep.subr.mxu0 0.0
    %1406 = vmatpush2.msra.mxu0 0.0
    %1407 = vmatprep.subr.mxu0 0.0
    %1408 = vmatpush2.msra.mxu0 0.0
    %1409 = vmatprep.subr.mxu0 0.0
    %1410 = vmatpush2.msra.mxu0 0.0
    %1411 = vmatprep.mubr.f32.mxu0 0.0
    %1412 = vmatmul.mubr.f32.gmra.mxu0 %v1345
    %v1413 = vpop.f32.mrf.mxu0
    %v1414 = vadd.f32 0.0, %v1413
    %v1415 = vpop.f32.mrf.mxu0
    %1416 = vdwg.mxu0
    %v1418 = vrot.slane %v1414, 6
    %v1420 = vadd.f32 %v1217, %v1418
    %v1421 = vxor.u32 %v1420, 2147483648
    %v1422 = vmul.f32 %v1421, 1.442695
    %v1423 = vpow.pop %v1422
    %v1424 = vadd.f32 %v1423, 1.0
    %v1425 = vrcp.pop %v1424
    %v1426 = vmul.f32 1.0, %v1425
    %v1427 = vtanh.pop %v1420
    %v1429 = vrot.slane %v1324, 6
    %v1431 = vmul.f32 %v1426, %v1429
    %1433 = vrot.lane.b32.xlu0 %v1427, 32
    %v1434 = vpop.permute.xlu0 %1433
    %v1436 = vmul.f32 %v1426, %v1434
    %1438 = vrot.lane.b32.xlu0 %v1436, 32
    %v1439 = vpop.permute.xlu0 %1438
    %v1441 = vadd.f32 %v1431, %v1439
    %v1442 = vtanh.pop %v1441
    %1444 = vrot.lane.b32.xlu0 %v1442, 32
    %v1445 = vpop.permute.xlu0 %1444
    %v1447 = vmul.f32 %v1426, %v1445
    %v1450 = vunpack.c.l.s4 1983009808
    %v1451 = vunpack.c.0.s8 %v1450
    %v1452 = vlaneseq
    %v1453 = vshrl.u32 %v1452, 7
    %v1454 = vsub.s32 %v1451, %v1453
    %v1455 = vrot.slane %v1447, %v1454
    %v1456 = vcombine.high %v1455, %v1455
    %1457 = vrot.lane.b32.xlu0 %v1456, 96
    %v1458 = vpop.permute.xlu0 %1457
    %vm1460 = vcmask 517376
    %1461 = vst.msk [vmem:[#allocation3] sm:$0x3] %vm1460, %v1458
    %v1462 = vrot.slane %v1447, 2
    %1463 = vrot.lane.b32.xlu0 %v1462, 64
    %v1464 = vpop.permute.xlu0 %1463
    %v1465 = vsel %vm247, %v1464, 0
    %1467 = vmatprep.subr.mxu0 0.0
    %1468 = vmatpush1.msra.mxu0 0.0
    %1469 = vmatprep.subr.mxu0 0.0
    %1470 = vmatpush1.msra.mxu0 0.0
    %1471 = vmatprep.subr.mxu0 0.0
    %1472 = vmatpush1.msra.mxu0 0.0
    %1473 = vmatprep.subr.mxu0 0.0
    %1474 = vmatpush1.msra.mxu0 0.0
    %1475 = vmatprep.subr.mxu0 0.0
    %1476 = vmatpush1.msra.mxu0 0.0
    %1477 = vmatprep.subr.mxu0 0.0
    %1478 = vmatpush1.msra.mxu0 0.0
    %1479 = vmatprep.subr.mxu0 0.0
    %1480 = vmatpush1.msra.mxu0 0.0
    %1481 = vmatprep.subr.mxu0 0.0
    %1482 = vmatpush1.msra.mxu0 0.0
    %1483 = vmatprep.subr.mxu0 0.0
    %1484 = vmatpush1.msra.mxu0 0.0
    %1485 = vmatprep.subr.mxu0 0.0
    %1486 = vmatpush1.msra.mxu0 0.0
    %1487 = vmatprep.subr.mxu0 0.0
    %1488 = vmatpush1.msra.mxu0 0.0
    %1489 = vmatprep.subr.mxu0 0.0
    %1490 = vmatpush1.msra.mxu0 0.0
    %1491 = vmatprep.subr.mxu0 0.0
    %1492 = vmatpush1.msra.mxu0 %v1134
    %1493 = vmatprep.subr.mxu0 0.0
    %1494 = vmatpush1.msra.mxu0 %v1133
    %1495 = vmatprep.subr.mxu0 0.0
    %1496 = vmatpush1.msra.mxu0 %v1132
    %1497 = vmatprep.subr.mxu0 0.0
    %1498 = vmatpush1.msra.mxu0 %v1131
    %1499 = vmatprep.subr.mxu0 0.0
    %1500 = vmatpush2.msra.mxu0 0.0
    %1501 = vmatprep.subr.mxu0 0.0
    %1502 = vmatpush2.msra.mxu0 0.0
    %1503 = vmatprep.subr.mxu0 0.0
    %1504 = vmatpush2.msra.mxu0 0.0
    %1505 = vmatprep.subr.mxu0 0.0
    %1506 = vmatpush2.msra.mxu0 0.0
    %1507 = vmatprep.subr.mxu0 0.0
    %1508 = vmatpush2.msra.mxu0 0.0
    %1509 = vmatprep.subr.mxu0 0.0
    %1510 = vmatpush2.msra.mxu0 0.0
    %1511 = vmatprep.subr.mxu0 0.0
    %1512 = vmatpush2.msra.mxu0 0.0
    %1513 = vmatprep.subr.mxu0 0.0
    %1514 = vmatpush2.msra.mxu0 0.0
    %1515 = vmatprep.subr.mxu0 0.0
    %1516 = vmatpush2.msra.mxu0 0.0
    %1517 = vmatprep.subr.mxu0 0.0
    %1518 = vmatpush2.msra.mxu0 0.0
    %1519 = vmatprep.subr.mxu0 0.0
    %1520 = vmatpush2.msra.mxu0 0.0
    %1521 = vmatprep.subr.mxu0 0.0
    %1522 = vmatpush2.msra.mxu0 0.0
    %1523 = vmatprep.subr.mxu0 0.0
    %1524 = vmatpush2.msra.mxu0 0.0
    %1525 = vmatprep.subr.mxu0 0.0
    %1526 = vmatpush2.msra.mxu0 0.0
    %1527 = vmatprep.subr.mxu0 0.0
    %1528 = vmatpush2.msra.mxu0 0.0
    %1529 = vmatprep.subr.mxu0 0.0
    %1530 = vmatpush2.msra.mxu0 0.0
    %1531 = vmatprep.mubr.f32.mxu0 0.0
    %1532 = vmatmul.mubr.f32.gmra.mxu0 %v1465
    %v1533 = vpop.f32.mrf.mxu0
    %v1534 = vadd.f32 0.0, %v1533
    %v1535 = vpop.f32.mrf.mxu0
    %1536 = vdwg.mxu0
    %v1538 = vrot.slane %v1534, 4
    %v1540 = vadd.f32 %v1217, %v1538
    %v1541 = vxor.u32 %v1540, 2147483648
    %v1542 = vmul.f32 %v1541, 1.442695
    %v1543 = vpow.pop %v1542
    %v1544 = vadd.f32 %v1543, 1.0
    %v1545 = vrcp.pop %v1544
    %v1546 = vmul.f32 1.0, %v1545
    %v1547 = vtanh.pop %v1540
    %v1549 = vrot.slane %v1441, 6
    %v1551 = vmul.f32 %v1546, %v1549
    %1553 = vrot.lane.b32.xlu0 %v1547, 32
    %v1554 = vpop.permute.xlu0 %1553
    %v1556 = vmul.f32 %v1546, %v1554
    %1558 = vrot.lane.b32.xlu0 %v1556, 32
    %v1559 = vpop.permute.xlu0 %1558
    %v1561 = vadd.f32 %v1551, %v1559
    %v1562 = vtanh.pop %v1561
    %1564 = vrot.lane.b32.xlu0 %v1562, 32
    %v1565 = vpop.permute.xlu0 %1564
    %v1567 = vmul.f32 %v1546, %v1565
    %v1569 = vcombine.high %v1567, %v1567
    %v1571 = vunpack.c.l.s4 1983009808
    %v1572 = vunpack.c.0.s8 %v1571
    %v1573 = vlaneseq
    %v1574 = vshrl.u32 %v1573, 7
    %v1575 = vsub.s32 %v1572, %v1574
    %v1576 = vrot.slane %v1569, %v1575
    %vm1578 = vcmask 779776
    %1579 = vst.msk [vmem:[#allocation3] sm:$0x3] %vm1578, %v1576
    %v1580 = vrot.slane %v1567, 4
    %1581 = vrot.lane.b32.xlu0 %v1580, 64
    %v1582 = vpop.permute.xlu0 %1581
    %v1583 = vsel %vm247, %v1582, 0
    %1585 = vmatprep.subr.mxu0 0.0
    %1586 = vmatpush1.msra.mxu0 0.0
    %1587 = vmatprep.subr.mxu0 0.0
    %1588 = vmatpush1.msra.mxu0 0.0
    %1589 = vmatprep.subr.mxu0 0.0
    %1590 = vmatpush1.msra.mxu0 0.0
    %1591 = vmatprep.subr.mxu0 0.0
    %1592 = vmatpush1.msra.mxu0 0.0
    %1593 = vmatprep.subr.mxu0 0.0
    %1594 = vmatpush1.msra.mxu0 0.0
    %1595 = vmatprep.subr.mxu0 0.0
    %1596 = vmatpush1.msra.mxu0 0.0
    %1597 = vmatprep.subr.mxu0 0.0
    %1598 = vmatpush1.msra.mxu0 0.0
    %1599 = vmatprep.subr.mxu0 0.0
    %1600 = vmatpush1.msra.mxu0 0.0
    %1601 = vmatprep.subr.mxu0 0.0
    %1602 = vmatpush1.msra.mxu0 0.0
    %1603 = vmatprep.subr.mxu0 0.0
    %1604 = vmatpush1.msra.mxu0 0.0
    %1605 = vmatprep.subr.mxu0 0.0
    %1606 = vmatpush1.msra.mxu0 0.0
    %1607 = vmatprep.subr.mxu0 0.0
    %1608 = vmatpush1.msra.mxu0 0.0
    %1609 = vmatprep.subr.mxu0 0.0
    %1610 = vmatpush1.msra.mxu0 %v1134
    %1611 = vmatprep.subr.mxu0 0.0
    %1612 = vmatpush1.msra.mxu0 %v1133
    %1613 = vmatprep.subr.mxu0 0.0
    %1614 = vmatpush1.msra.mxu0 %v1132
    %1615 = vmatprep.subr.mxu0 0.0
    %1616 = vmatpush1.msra.mxu0 %v1131
    %1617 = vmatprep.subr.mxu0 0.0
    %1618 = vmatpush2.msra.mxu0 0.0
    %1619 = vmatprep.subr.mxu0 0.0
    %1620 = vmatpush2.msra.mxu0 0.0
    %1621 = vmatprep.subr.mxu0 0.0
    %1622 = vmatpush2.msra.mxu0 0.0
    %1623 = vmatprep.subr.mxu0 0.0
    %1624 = vmatpush2.msra.mxu0 0.0
    %1625 = vmatprep.subr.mxu0 0.0
    %1626 = vmatpush2.msra.mxu0 0.0
    %1627 = vmatprep.subr.mxu0 0.0
    %1628 = vmatpush2.msra.mxu0 0.0
    %1629 = vmatprep.subr.mxu0 0.0
    %1630 = vmatpush2.msra.mxu0 0.0
    %1631 = vmatprep.subr.mxu0 0.0
    %1632 = vmatpush2.msra.mxu0 0.0
    %1633 = vmatprep.subr.mxu0 0.0
    %1634 = vmatpush2.msra.mxu0 0.0
    %1635 = vmatprep.subr.mxu0 0.0
    %1636 = vmatpush2.msra.mxu0 0.0
    %1637 = vmatprep.subr.mxu0 0.0
    %1638 = vmatpush2.msra.mxu0 0.0
    %1639 = vmatprep.subr.mxu0 0.0
    %1640 = vmatpush2.msra.mxu0 0.0
    %1641 = vmatprep.subr.mxu0 0.0
    %1642 = vmatpush2.msra.mxu0 0.0
    %1643 = vmatprep.subr.mxu0 0.0
    %1644 = vmatpush2.msra.mxu0 0.0
    %1645 = vmatprep.subr.mxu0 0.0
    %1646 = vmatpush2.msra.mxu0 0.0
    %1647 = vmatprep.subr.mxu0 0.0
    %1648 = vmatpush2.msra.mxu0 0.0
    %1649 = vmatprep.mubr.f32.mxu0 0.0
    %1650 = vmatmul.mubr.f32.gmra.mxu0 %v1583
    %v1651 = vpop.f32.mrf.mxu0
    %v1652 = vadd.f32 0.0, %v1651
    %v1653 = vpop.f32.mrf.mxu0
    %1654 = vdwg.mxu0
    %v1656 = vrot.slane %v1652, 2
    %v1658 = vadd.f32 %v1217, %v1656
    %v1659 = vxor.u32 %v1658, 2147483648
    %v1660 = vmul.f32 %v1659, 1.442695
    %v1661 = vpow.pop %v1660
    %v1662 = vadd.f32 %v1661, 1.0
    %v1663 = vrcp.pop %v1662
    %v1664 = vmul.f32 1.0, %v1663
    %v1665 = vtanh.pop %v1658
    %v1667 = vrot.slane %v1561, 6
    %v1669 = vmul.f32 %v1664, %v1667
    %1671 = vrot.lane.b32.xlu0 %v1665, 32
    %v1672 = vpop.permute.xlu0 %1671
    %v1674 = vmul.f32 %v1664, %v1672
    %1676 = vrot.lane.b32.xlu0 %v1674, 32
    %v1677 = vpop.permute.xlu0 %1676
    %v1679 = vadd.f32 %v1669, %v1677
    %v1680 = vtanh.pop %v1679
    %1682 = vrot.lane.b32.xlu0 %v1680, 32
    %v1683 = vpop.permute.xlu0 %1682
    %v1685 = vmul.f32 %v1664, %v1683
    %v1687 = vcombine.high %v1685, %v1685
    %v1689 = vunpack.c.l.s4 1983009808
    %v1690 = vunpack.c.0.s8 %v1689
    %v1691 = vlaneseq
    %v1692 = vshrl.u32 %v1691, 7
    %v1693 = vsub.s32 %v1690, %v1692
    %v1694 = vrot.slane %v1687, %v1693
    %v1695 = vcombine.high %v1694, %v1694
    %1696 = vrot.lane.b32.xlu0 %v1695, 32
    %v1697 = vpop.permute.xlu0 %1696
    %vm1699 = vcmask 1042176
    %1700 = vst.msk [vmem:[#allocation3] sm:$0x3] %vm1699, %v1697
    %v1701 = vrot.slane %v1685, 6
    %1702 = vrot.lane.b32.xlu0 %v1701, 64
    %v1703 = vpop.permute.xlu0 %1702
    %v1704 = vsel %vm247, %v1703, 0
    %1706 = vmatprep.subr.mxu0 0.0
    %1707 = vmatpush1.msra.mxu0 0.0
    %1708 = vmatprep.subr.mxu0 0.0
    %1709 = vmatpush1.msra.mxu0 0.0
    %1710 = vmatprep.subr.mxu0 0.0
    %1711 = vmatpush1.msra.mxu0 0.0
    %1712 = vmatprep.subr.mxu0 0.0
    %1713 = vmatpush1.msra.mxu0 0.0
    %1714 = vmatprep.subr.mxu0 0.0
    %1715 = vmatpush1.msra.mxu0 0.0
    %1716 = vmatprep.subr.mxu0 0.0
    %1717 = vmatpush1.msra.mxu0 0.0
    %1718 = vmatprep.subr.mxu0 0.0
    %1719 = vmatpush1.msra.mxu0 0.0
    %1720 = vmatprep.subr.mxu0 0.0
    %1721 = vmatpush1.msra.mxu0 0.0
    %1722 = vmatprep.subr.mxu0 0.0
    %1723 = vmatpush1.msra.mxu0 0.0
    %1724 = vmatprep.subr.mxu0 0.0
    %1725 = vmatpush1.msra.mxu0 0.0
    %1726 = vmatprep.subr.mxu0 0.0
    %1727 = vmatpush1.msra.mxu0 0.0
    %1728 = vmatprep.subr.mxu0 0.0
    %1729 = vmatpush1.msra.mxu0 0.0
    %1730 = vmatprep.subr.mxu0 0.0
    %1731 = vmatpush1.msra.mxu0 %v1134
    %1732 = vmatprep.subr.mxu0 0.0
    %1733 = vmatpush1.msra.mxu0 %v1133
    %1734 = vmatprep.subr.mxu0 0.0
    %1735 = vmatpush1.msra.mxu0 %v1132
    %1736 = vmatprep.subr.mxu0 0.0
    %1737 = vmatpush1.msra.mxu0 %v1131
    %1738 = vmatprep.subr.mxu0 0.0
    %1739 = vmatpush2.msra.mxu0 0.0
    %1740 = vmatprep.subr.mxu0 0.0
    %1741 = vmatpush2.msra.mxu0 0.0
    %1742 = vmatprep.subr.mxu0 0.0
    %1743 = vmatpush2.msra.mxu0 0.0
    %1744 = vmatprep.subr.mxu0 0.0
    %1745 = vmatpush2.msra.mxu0 0.0
    %1746 = vmatprep.subr.mxu0 0.0
    %1747 = vmatpush2.msra.mxu0 0.0
    %1748 = vmatprep.subr.mxu0 0.0
    %1749 = vmatpush2.msra.mxu0 0.0
    %1750 = vmatprep.subr.mxu0 0.0
    %1751 = vmatpush2.msra.mxu0 0.0
    %1752 = vmatprep.subr.mxu0 0.0
    %1753 = vmatpush2.msra.mxu0 0.0
    %1754 = vmatprep.subr.mxu0 0.0
    %1755 = vmatpush2.msra.mxu0 0.0
    %1756 = vmatprep.subr.mxu0 0.0
    %1757 = vmatpush2.msra.mxu0 0.0
    %1758 = vmatprep.subr.mxu0 0.0
    %1759 = vmatpush2.msra.mxu0 0.0
    %1760 = vmatprep.subr.mxu0 0.0
    %1761 = vmatpush2.msra.mxu0 0.0
    %1762 = vmatprep.subr.mxu0 0.0
    %1763 = vmatpush2.msra.mxu0 0.0
    %1764 = vmatprep.subr.mxu0 0.0
    %1765 = vmatpush2.msra.mxu0 0.0
    %1766 = vmatprep.subr.mxu0 0.0
    %1767 = vmatpush2.msra.mxu0 0.0
    %1768 = vmatprep.subr.mxu0 0.0
    %1769 = vmatpush2.msra.mxu0 0.0
    %1770 = vmatprep.mubr.f32.mxu0 0.0
    %1771 = vmatmul.mubr.f32.gmra.mxu0 %v1704
    %v1772 = vpop.f32.mrf.mxu0
    %v1773 = vadd.f32 0.0, %v1772
    %v1774 = vpop.f32.mrf.mxu0
    %1775 = vdwg.mxu0
    %v1776 = vadd.f32 %v1222, %v1773
    %v1777 = vxor.u32 %v1776, 2147483648
    %v1778 = vmul.f32 %v1777, 1.442695
    %v1779 = vpow.pop %v1778
    %v1780 = vadd.f32 %v1779, 1.0
    %v1781 = vrcp.pop %v1780
    %v1782 = vmul.f32 1.0, %v1781
    %v1783 = vtanh.pop %v1776
    %v1785 = vrot.slane %v1679, 6
    %v1787 = vmul.f32 %v1782, %v1785
    %1789 = vrot.lane.b32.xlu0 %v1783, 32
    %v1790 = vpop.permute.xlu0 %1789
    %v1792 = vmul.f32 %v1782, %v1790
    %1794 = vrot.lane.b32.xlu0 %v1792, 32
    %v1795 = vpop.permute.xlu0 %1794
    %v1797 = vadd.f32 %v1787, %v1795
    %v1798 = vtanh.pop %v1797
    %1800 = vrot.lane.b32.xlu0 %v1798, 32
    %v1801 = vpop.permute.xlu0 %1800
    %v1803 = vmul.f32 %v1782, %v1801
    %v1806 = vunpack.c.l.s4 1983009808
    %v1807 = vunpack.c.0.s8 %v1806
    %v1808 = vlaneseq
    %v1809 = vshrl.u32 %v1808, 7
    %v1810 = vsub.s32 %v1807, %v1809
    %v1811 = vrot.slane %v1803, %v1810
    %1812 = vrot.lane.b32.xlu0 %v1811, 64
    %v1813 = vpop.permute.xlu0 %1812
    %1815 = vst.msk [vmem:[#allocation3 + $0x2] sm:$0x3] %vm354, %v1813
    %1816 = vrot.lane.b32.xlu0 %v1803, 64
    %v1817 = vpop.permute.xlu0 %1816
    %v1818 = vsel %vm247, %v1817, 0
    %1820 = vmatprep.subr.mxu0 0.0
    %1821 = vmatpush1.msra.mxu0 0.0
    %1822 = vmatprep.subr.mxu0 0.0
    %1823 = vmatpush1.msra.mxu0 0.0
    %1824 = vmatprep.subr.mxu0 0.0
    %1825 = vmatpush1.msra.mxu0 0.0
    %1826 = vmatprep.subr.mxu0 0.0
    %1827 = vmatpush1.msra.mxu0 0.0
    %1828 = vmatprep.subr.mxu0 0.0
    %1829 = vmatpush1.msra.mxu0 0.0
    %1830 = vmatprep.subr.mxu0 0.0
    %1831 = vmatpush1.msra.mxu0 0.0
    %1832 = vmatprep.subr.mxu0 0.0
    %1833 = vmatpush1.msra.mxu0 0.0
    %1834 = vmatprep.subr.mxu0 0.0
    %1835 = vmatpush1.msra.mxu0 0.0
    %1836 = vmatprep.subr.mxu0 0.0
    %1837 = vmatpush1.msra.mxu0 0.0
    %1838 = vmatprep.subr.mxu0 0.0
    %1839 = vmatpush1.msra.mxu0 0.0
    %1840 = vmatprep.subr.mxu0 0.0
    %1841 = vmatpush1.msra.mxu0 0.0
    %1842 = vmatprep.subr.mxu0 0.0
    %1843 = vmatpush1.msra.mxu0 0.0
    %1844 = vmatprep.subr.mxu0 0.0
    %1845 = vmatpush1.msra.mxu0 %v1134
    %1846 = vmatprep.subr.mxu0 0.0
    %1847 = vmatpush1.msra.mxu0 %v1133
    %1848 = vmatprep.subr.mxu0 0.0
    %1849 = vmatpush1.msra.mxu0 %v1132
    %1850 = vmatprep.subr.mxu0 0.0
    %1851 = vmatpush1.msra.mxu0 %v1131
    %1852 = vmatprep.subr.mxu0 0.0
    %1853 = vmatpush2.msra.mxu0 0.0
    %1854 = vmatprep.subr.mxu0 0.0
    %1855 = vmatpush2.msra.mxu0 0.0
    %1856 = vmatprep.subr.mxu0 0.0
    %1857 = vmatpush2.msra.mxu0 0.0
    %1858 = vmatprep.subr.mxu0 0.0
    %1859 = vmatpush2.msra.mxu0 0.0
    %1860 = vmatprep.subr.mxu0 0.0
    %1861 = vmatpush2.msra.mxu0 0.0
    %1862 = vmatprep.subr.mxu0 0.0
    %1863 = vmatpush2.msra.mxu0 0.0
    %1864 = vmatprep.subr.mxu0 0.0
    %1865 = vmatpush2.msra.mxu0 0.0
    %1866 = vmatprep.subr.mxu0 0.0
    %1867 = vmatpush2.msra.mxu0 0.0
    %1868 = vmatprep.subr.mxu0 0.0
    %1869 = vmatpush2.msra.mxu0 0.0
    %1870 = vmatprep.subr.mxu0 0.0
    %1871 = vmatpush2.msra.mxu0 0.0
    %1872 = vmatprep.subr.mxu0 0.0
    %1873 = vmatpush2.msra.mxu0 0.0
    %1874 = vmatprep.subr.mxu0 0.0
    %1875 = vmatpush2.msra.mxu0 0.0
    %1876 = vmatprep.subr.mxu0 0.0
    %1877 = vmatpush2.msra.mxu0 0.0
    %1878 = vmatprep.subr.mxu0 0.0
    %1879 = vmatpush2.msra.mxu0 0.0
    %1880 = vmatprep.subr.mxu0 0.0
    %1881 = vmatpush2.msra.mxu0 0.0
    %1882 = vmatprep.subr.mxu0 0.0
    %1883 = vmatpush2.msra.mxu0 0.0
    %1884 = vmatprep.mubr.f32.mxu0 0.0
    %1885 = vmatmul.mubr.f32.gmra.mxu0 %v1818
    %v1886 = vpop.f32.mrf.mxu0
    %v1887 = vadd.f32 0.0, %v1886
    %v1888 = vpop.f32.mrf.mxu0
    %1889 = vdwg.mxu0
    %v1891 = vrot.slane %v1887, 6
    %v1893 = vadd.f32 %v1222, %v1891
    %v1894 = vxor.u32 %v1893, 2147483648
    %v1895 = vmul.f32 %v1894, 1.442695
    %v1896 = vpow.pop %v1895
    %v1897 = vadd.f32 %v1896, 1.0
    %v1898 = vrcp.pop %v1897
    %v1899 = vmul.f32 1.0, %v1898
    %v1900 = vtanh.pop %v1893
    %v1902 = vrot.slane %v1797, 6
    %v1904 = vmul.f32 %v1899, %v1902
    %1906 = vrot.lane.b32.xlu0 %v1900, 32
    %v1907 = vpop.permute.xlu0 %1906
    %v1909 = vmul.f32 %v1899, %v1907
    %1911 = vrot.lane.b32.xlu0 %v1909, 32
    %v1912 = vpop.permute.xlu0 %1911
    %v1914 = vadd.f32 %v1904, %v1912
    %v1915 = vtanh.pop %v1914
    %1917 = vrot.lane.b32.xlu0 %v1915, 32
    %v1918 = vpop.permute.xlu0 %1917
    %v1920 = vmul.f32 %v1899, %v1918
    %v1923 = vunpack.c.l.s4 1983009808
    %v1924 = vunpack.c.0.s8 %v1923
    %v1925 = vlaneseq
    %v1926 = vshrl.u32 %v1925, 7
    %v1927 = vsub.s32 %v1924, %v1926
    %v1928 = vrot.slane %v1920, %v1927
    %v1929 = vcombine.high %v1928, %v1928
    %1930 = vrot.lane.b32.xlu0 %v1929, 96
    %v1931 = vpop.permute.xlu0 %1930
    %1933 = vst.msk [vmem:[#allocation3 + $0x2] sm:$0x3] %vm1460, %v1931
    %v1934 = vrot.slane %v1920, 2
    %1935 = vrot.lane.b32.xlu0 %v1934, 64
    %v1936 = vpop.permute.xlu0 %1935
    %v1937 = vsel %vm247, %v1936, 0
    %1939 = vmatprep.subr.mxu0 0.0
    %1940 = vmatpush1.msra.mxu0 0.0
    %1941 = vmatprep.subr.mxu0 0.0
    %1942 = vmatpush1.msra.mxu0 0.0
    %1943 = vmatprep.subr.mxu0 0.0
    %1944 = vmatpush1.msra.mxu0 0.0
    %1945 = vmatprep.subr.mxu0 0.0
    %1946 = vmatpush1.msra.mxu0 0.0
    %1947 = vmatprep.subr.mxu0 0.0
    %1948 = vmatpush1.msra.mxu0 0.0
    %1949 = vmatprep.subr.mxu0 0.0
    %1950 = vmatpush1.msra.mxu0 0.0
    %1951 = vmatprep.subr.mxu0 0.0
    %1952 = vmatpush1.msra.mxu0 0.0
    %1953 = vmatprep.subr.mxu0 0.0
    %1954 = vmatpush1.msra.mxu0 0.0
    %1955 = vmatprep.subr.mxu0 0.0
    %1956 = vmatpush1.msra.mxu0 0.0
    %1957 = vmatprep.subr.mxu0 0.0
    %1958 = vmatpush1.msra.mxu0 0.0
    %1959 = vmatprep.subr.mxu0 0.0
    %1960 = vmatpush1.msra.mxu0 0.0
    %1961 = vmatprep.subr.mxu0 0.0
    %1962 = vmatpush1.msra.mxu0 0.0
    %1963 = vmatprep.subr.mxu0 0.0
    %1964 = vmatpush1.msra.mxu0 %v1134
    %1965 = vmatprep.subr.mxu0 0.0
    %1966 = vmatpush1.msra.mxu0 %v1133
    %1967 = vmatprep.subr.mxu0 0.0
    %1968 = vmatpush1.msra.mxu0 %v1132
    %1969 = vmatprep.subr.mxu0 0.0
    %1970 = vmatpush1.msra.mxu0 %v1131
    %1971 = vmatprep.subr.mxu0 0.0
    %1972 = vmatpush2.msra.mxu0 0.0
    %1973 = vmatprep.subr.mxu0 0.0
    %1974 = vmatpush2.msra.mxu0 0.0
    %1975 = vmatprep.subr.mxu0 0.0
    %1976 = vmatpush2.msra.mxu0 0.0
    %1977 = vmatprep.subr.mxu0 0.0
    %1978 = vmatpush2.msra.mxu0 0.0
    %1979 = vmatprep.subr.mxu0 0.0
    %1980 = vmatpush2.msra.mxu0 0.0
    %1981 = vmatprep.subr.mxu0 0.0
    %1982 = vmatpush2.msra.mxu0 0.0
    %1983 = vmatprep.subr.mxu0 0.0
    %1984 = vmatpush2.msra.mxu0 0.0
    %1985 = vmatprep.subr.mxu0 0.0
    %1986 = vmatpush2.msra.mxu0 0.0
    %1987 = vmatprep.subr.mxu0 0.0
    %1988 = vmatpush2.msra.mxu0 0.0
    %1989 = vmatprep.subr.mxu0 0.0
    %1990 = vmatpush2.msra.mxu0 0.0
    %1991 = vmatprep.subr.mxu0 0.0
    %1992 = vmatpush2.msra.mxu0 0.0
    %1993 = vmatprep.subr.mxu0 0.0
    %1994 = vmatpush2.msra.mxu0 0.0
    %1995 = vmatprep.subr.mxu0 0.0
    %1996 = vmatpush2.msra.mxu0 0.0
    %1997 = vmatprep.subr.mxu0 0.0
    %1998 = vmatpush2.msra.mxu0 0.0
    %1999 = vmatprep.subr.mxu0 0.0
    %2000 = vmatpush2.msra.mxu0 0.0
    %2001 = vmatprep.subr.mxu0 0.0
    %2002 = vmatpush2.msra.mxu0 0.0
    %2003 = vmatprep.mubr.f32.mxu0 0.0
    %2004 = vmatmul.mubr.f32.gmra.mxu0 %v1937
    %v2005 = vpop.f32.mrf.mxu0
    %v2006 = vadd.f32 0.0, %v2005
    %v2007 = vpop.f32.mrf.mxu0
    %2008 = vdwg.mxu0
    %v2010 = vrot.slane %v2006, 4
    %v2012 = vadd.f32 %v1222, %v2010
    %v2013 = vxor.u32 %v2012, 2147483648
    %v2014 = vmul.f32 %v2013, 1.442695
    %v2015 = vpow.pop %v2014
    %v2016 = vadd.f32 %v2015, 1.0
    %v2017 = vrcp.pop %v2016
    %v2018 = vmul.f32 1.0, %v2017
    %v2019 = vtanh.pop %v2012
    %v2021 = vrot.slane %v1914, 6
    %v2023 = vmul.f32 %v2018, %v2021
    %2025 = vrot.lane.b32.xlu0 %v2019, 32
    %v2026 = vpop.permute.xlu0 %2025
    %v2028 = vmul.f32 %v2018, %v2026
    %2030 = vrot.lane.b32.xlu0 %v2028, 32
    %v2031 = vpop.permute.xlu0 %2030
    %v2033 = vadd.f32 %v2023, %v2031
    %v2034 = vtanh.pop %v2033
    %2036 = vrot.lane.b32.xlu0 %v2034, 32
    %v2037 = vpop.permute.xlu0 %2036
    %v2039 = vmul.f32 %v2018, %v2037
    %v2041 = vcombine.high %v2039, %v2039
    %v2043 = vunpack.c.l.s4 1983009808
    %v2044 = vunpack.c.0.s8 %v2043
    %v2045 = vlaneseq
    %v2046 = vshrl.u32 %v2045, 7
    %v2047 = vsub.s32 %v2044, %v2046
    %v2048 = vrot.slane %v2041, %v2047
    %2050 = vst.msk [vmem:[#allocation3 + $0x2] sm:$0x3] %vm1578, %v2048
    %v2051 = vrot.slane %v2039, 4
    %2052 = vrot.lane.b32.xlu0 %v2051, 64
    %v2053 = vpop.permute.xlu0 %2052
    %v2054 = vsel %vm247, %v2053, 0
    %2056 = vmatprep.subr.mxu0 0.0
    %2057 = vmatpush1.msra.mxu0 0.0
    %2058 = vmatprep.subr.mxu0 0.0
    %2059 = vmatpush1.msra.mxu0 0.0
    %2060 = vmatprep.subr.mxu0 0.0
    %2061 = vmatpush1.msra.mxu0 0.0
    %2062 = vmatprep.subr.mxu0 0.0
    %2063 = vmatpush1.msra.mxu0 0.0
    %2064 = vmatprep.subr.mxu0 0.0
    %2065 = vmatpush1.msra.mxu0 0.0
    %2066 = vmatprep.subr.mxu0 0.0
    %2067 = vmatpush1.msra.mxu0 0.0
    %2068 = vmatprep.subr.mxu0 0.0
    %2069 = vmatpush1.msra.mxu0 0.0
    %2070 = vmatprep.subr.mxu0 0.0
    %2071 = vmatpush1.msra.mxu0 0.0
    %2072 = vmatprep.subr.mxu0 0.0
    %2073 = vmatpush1.msra.mxu0 0.0
    %2074 = vmatprep.subr.mxu0 0.0
    %2075 = vmatpush1.msra.mxu0 0.0
    %2076 = vmatprep.subr.mxu0 0.0
    %2077 = vmatpush1.msra.mxu0 0.0
    %2078 = vmatprep.subr.mxu0 0.0
    %2079 = vmatpush1.msra.mxu0 0.0
    %2080 = vmatprep.subr.mxu0 0.0
    %2081 = vmatpush1.msra.mxu0 %v1134
    %2082 = vmatprep.subr.mxu0 0.0
    %2083 = vmatpush1.msra.mxu0 %v1133
    %2084 = vmatprep.subr.mxu0 0.0
    %2085 = vmatpush1.msra.mxu0 %v1132
    %2086 = vmatprep.subr.mxu0 0.0
    %2087 = vmatpush1.msra.mxu0 %v1131
    %2088 = vmatprep.subr.mxu0 0.0
    %2089 = vmatpush2.msra.mxu0 0.0
    %2090 = vmatprep.subr.mxu0 0.0
    %2091 = vmatpush2.msra.mxu0 0.0
    %2092 = vmatprep.subr.mxu0 0.0
    %2093 = vmatpush2.msra.mxu0 0.0
    %2094 = vmatprep.subr.mxu0 0.0
    %2095 = vmatpush2.msra.mxu0 0.0
    %2096 = vmatprep.subr.mxu0 0.0
    %2097 = vmatpush2.msra.mxu0 0.0
    %2098 = vmatprep.subr.mxu0 0.0
    %2099 = vmatpush2.msra.mxu0 0.0
    %2100 = vmatprep.subr.mxu0 0.0
    %2101 = vmatpush2.msra.mxu0 0.0
    %2102 = vmatprep.subr.mxu0 0.0
    %2103 = vmatpush2.msra.mxu0 0.0
    %2104 = vmatprep.subr.mxu0 0.0
    %2105 = vmatpush2.msra.mxu0 0.0
    %2106 = vmatprep.subr.mxu0 0.0
    %2107 = vmatpush2.msra.mxu0 0.0
    %2108 = vmatprep.subr.mxu0 0.0
    %2109 = vmatpush2.msra.mxu0 0.0
    %2110 = vmatprep.subr.mxu0 0.0
    %2111 = vmatpush2.msra.mxu0 0.0
    %2112 = vmatprep.subr.mxu0 0.0
    %2113 = vmatpush2.msra.mxu0 0.0
    %2114 = vmatprep.subr.mxu0 0.0
    %2115 = vmatpush2.msra.mxu0 0.0
    %2116 = vmatprep.subr.mxu0 0.0
    %2117 = vmatpush2.msra.mxu0 0.0
    %2118 = vmatprep.subr.mxu0 0.0
    %2119 = vmatpush2.msra.mxu0 0.0
    %2120 = vmatprep.mubr.f32.mxu0 0.0
    %2121 = vmatmul.mubr.f32.gmra.mxu0 %v2054
    %v2122 = vpop.f32.mrf.mxu0
    %v2123 = vadd.f32 0.0, %v2122
    %v2124 = vpop.f32.mrf.mxu0
    %2125 = vdwg.mxu0
    %v2127 = vrot.slane %v2123, 2
    %v2129 = vadd.f32 %v1222, %v2127
    %v2130 = vxor.u32 %v2129, 2147483648
    %v2131 = vmul.f32 %v2130, 1.442695
    %v2132 = vpow.pop %v2131
    %v2133 = vadd.f32 %v2132, 1.0
    %v2134 = vrcp.pop %v2133
    %v2135 = vmul.f32 1.0, %v2134
    %v2136 = vtanh.pop %v2129
    %v2138 = vrot.slane %v2033, 6
    %v2140 = vmul.f32 %v2135, %v2138
    %2142 = vrot.lane.b32.xlu0 %v2136, 32
    %v2143 = vpop.permute.xlu0 %2142
    %v2145 = vmul.f32 %v2135, %v2143
    %2147 = vrot.lane.b32.xlu0 %v2145, 32
    %v2148 = vpop.permute.xlu0 %2147
    %v2150 = vadd.f32 %v2140, %v2148
    %v2151 = vtanh.pop %v2150
    %2153 = vrot.lane.b32.xlu0 %v2151, 32
    %v2154 = vpop.permute.xlu0 %2153
    %v2156 = vmul.f32 %v2135, %v2154
    %v2158 = vcombine.high %v2156, %v2156
    %v2160 = vunpack.c.l.s4 1983009808
    %v2161 = vunpack.c.0.s8 %v2160
    %v2162 = vlaneseq
    %v2163 = vshrl.u32 %v2162, 7
    %v2164 = vsub.s32 %v2161, %v2163
    %v2165 = vrot.slane %v2158, %v2164
    %v2166 = vcombine.high %v2165, %v2165
    %2167 = vrot.lane.b32.xlu0 %v2166, 32
    %v2168 = vpop.permute.xlu0 %2167
    %2170 = vst.msk [vmem:[#allocation3 + $0x2] sm:$0x3] %vm1699, %v2168
    %v2171 = vld [vmem:[#allocation3] sm:$0xf]
    %v2172 = vld [vmem:[#allocation16] sm:$0xff]
    %v2173 = vld [vmem:[#allocation16 + $0x8] sm:$0xff]
    %v2174 = vld [vmem:[#allocation16 + $0x10] sm:$0xff]
    %v2175 = vld [vmem:[#allocation16 + $0x18] sm:$0xff]
    %v2176 = vld [vmem:[#allocation16 + $0x20] sm:$0xff]
    %v2177 = vld [vmem:[#allocation16 + $0x28] sm:$0xff]
    %v2178 = vld [vmem:[#allocation16 + $0x30] sm:$0xff]
    %v2179 = vld [vmem:[#allocation16 + $0x38] sm:$0xff]
    %v2180 = vld [vmem:[#allocation16 + $0x40] sm:$0xff]
    %v2181 = vld [vmem:[#allocation16 + $0x48] sm:$0xff]
    %v2182 = vld [vmem:[#allocation16 + $0x50] sm:$0xff]
    %v2183 = vld [vmem:[#allocation16 + $0x58] sm:$0xff]
    %v2184 = vld [vmem:[#allocation16 + $0x60] sm:$0xff]
    %v2185 = vld [vmem:[#allocation16 + $0x68] sm:$0xff]
    %v2186 = vld [vmem:[#allocation16 + $0x70] sm:$0xff]
    %v2187 = vld [vmem:[#allocation16 + $0x78] sm:$0xff]
    %v2188 = vld [vmem:[#allocation16 + $0x80] sm:$0xff]
    %v2189 = vld [vmem:[#allocation16 + $0x88] sm:$0xff]
    %v2190 = vld [vmem:[#allocation16 + $0x90] sm:$0xff]
    %v2191 = vld [vmem:[#allocation16 + $0x98] sm:$0xff]
    %v2192 = vld [vmem:[#allocation16 + $0xa0] sm:$0xff]
    %v2193 = vld [vmem:[#allocation16 + $0xa8] sm:$0xff]
    %v2194 = vld [vmem:[#allocation16 + $0xb0] sm:$0xff]
    %v2195 = vld [vmem:[#allocation16 + $0xb8] sm:$0xff]
    %v2196 = vld [vmem:[#allocation16 + $0xc0] sm:$0xff]
    %v2197 = vld [vmem:[#allocation16 + $0xc8] sm:$0xff]
    %v2198 = vld [vmem:[#allocation16 + $0xd0] sm:$0xff]
    %v2199 = vld [vmem:[#allocation16 + $0xd8] sm:$0xff]
    %v2200 = vld [vmem:[#allocation16 + $0xe0] sm:$0xff]
    %v2201 = vld [vmem:[#allocation16 + $0xe8] sm:$0xff]
    %v2202 = vld [vmem:[#allocation16 + $0xf0] sm:$0xff]
    %v2203 = vld [vmem:[#allocation16 + $0xf8] sm:$0xff]
    %v2204 = vld [vmem:[%s10] sm:$0x1]
    %v2206 = vlaneseq
    %v2207 = vshrl.u32 %v2206, 7
    %v2208 = vsub.s32 0, %v2207
    %v2209 = vrot.slane %v2204, %v2208
    %v2213 = vunpack.c.l.s4 1983009808
    %v2214 = vunpack.c.0.s8 %v2213
    %v2215 = vlaneseq
    %v2216 = vshrl.u32 %v2215, 7
    %v2217 = vsub.s32 %v2214, %v2216
    %v2218 = vrot.slane %v2171, %v2217
    %v2219 = vcombine.high %v2218, %v2218
    %2222 = vmatprep.subr.mxu0 0.0
    %2223 = vmatpush1.msra.mxu0 %v2187
    %2224 = vmatprep.subr.mxu0 0.0
    %2225 = vmatpush1.msra.mxu0 %v2186
    %2226 = vmatprep.subr.mxu0 0.0
    %2227 = vmatpush1.msra.mxu0 %v2185
    %2228 = vmatprep.subr.mxu0 0.0
    %2229 = vmatpush1.msra.mxu0 %v2184
    %2230 = vmatprep.subr.mxu0 0.0
    %2231 = vmatpush1.msra.mxu0 %v2183
    %2232 = vmatprep.subr.mxu0 0.0
    %2233 = vmatpush1.msra.mxu0 %v2182
    %2234 = vmatprep.subr.mxu0 0.0
    %2235 = vmatpush1.msra.mxu0 %v2181
    %2236 = vmatprep.subr.mxu0 0.0
    %2237 = vmatpush1.msra.mxu0 %v2180
    %2238 = vmatprep.subr.mxu0 0.0
    %2239 = vmatpush1.msra.mxu0 %v2179
    %2240 = vmatprep.subr.mxu0 0.0
    %2241 = vmatpush1.msra.mxu0 %v2178
    %2242 = vmatprep.subr.mxu0 0.0
    %2243 = vmatpush1.msra.mxu0 %v2177
    %2244 = vmatprep.subr.mxu0 0.0
    %2245 = vmatpush1.msra.mxu0 %v2176
    %2246 = vmatprep.subr.mxu0 0.0
    %2247 = vmatpush1.msra.mxu0 %v2175
    %2248 = vmatprep.subr.mxu0 0.0
    %2249 = vmatpush1.msra.mxu0 %v2174
    %2250 = vmatprep.subr.mxu0 0.0
    %2251 = vmatpush1.msra.mxu0 %v2173
    %2252 = vmatprep.subr.mxu0 0.0
    %2253 = vmatpush1.msra.mxu0 %v2172
    %2254 = vmatprep.subr.mxu0 0.0
    %2255 = vmatpush2.msra.mxu0 %v2203
    %2256 = vmatprep.subr.mxu0 0.0
    %2257 = vmatpush2.msra.mxu0 %v2202
    %2258 = vmatprep.subr.mxu0 0.0
    %2259 = vmatpush2.msra.mxu0 %v2201
    %2260 = vmatprep.subr.mxu0 0.0
    %2261 = vmatpush2.msra.mxu0 %v2200
    %2262 = vmatprep.subr.mxu0 0.0
    %2263 = vmatpush2.msra.mxu0 %v2199
    %2264 = vmatprep.subr.mxu0 0.0
    %2265 = vmatpush2.msra.mxu0 %v2198
    %2266 = vmatprep.subr.mxu0 0.0
    %2267 = vmatpush2.msra.mxu0 %v2197
    %2268 = vmatprep.subr.mxu0 0.0
    %2269 = vmatpush2.msra.mxu0 %v2196
    %2270 = vmatprep.subr.mxu0 0.0
    %2271 = vmatpush2.msra.mxu0 %v2195
    %2272 = vmatprep.subr.mxu0 0.0
    %2273 = vmatpush2.msra.mxu0 %v2194
    %2274 = vmatprep.subr.mxu0 0.0
    %2275 = vmatpush2.msra.mxu0 %v2193
    %2276 = vmatprep.subr.mxu0 0.0
    %2277 = vmatpush2.msra.mxu0 %v2192
    %2278 = vmatprep.subr.mxu0 0.0
    %2279 = vmatpush2.msra.mxu0 %v2191
    %2280 = vmatprep.subr.mxu0 0.0
    %2281 = vmatpush2.msra.mxu0 %v2190
    %2282 = vmatprep.subr.mxu0 0.0
    %2283 = vmatpush2.msra.mxu0 %v2189
    %2284 = vmatprep.subr.mxu0 0.0
    %2285 = vmatpush2.msra.mxu0 %v2188
    %2286 = vmatprep.mubr.f32.mxu0 %v2219
    %2287 = vmatmul.mubr.f32.gmra.mxu0 %v2218
    %v2288 = vpop.f32.mrf.mxu0
    %v2289 = vadd.f32 %v2209, %v2288
    %v2290 = vpop.f32.mrf.mxu0
    %2291 = vdwg.mxu0
    %2292 = vst [vmem:[#allocation18] sm:$0x3] %v2289
    // Predicated region
    $region78: #{tpu_custom_call.1} parent=1 // pred_check
      _
    $region79: #{tpu_custom_call.1} parent=1 // pred_check_branch
      %2294 = sbr.rel (0) target = $region81
    $region80: #{tpu_custom_call.1} parent=1 // pred_region
      %s2296 = ssub.s32 32, 32
      %2297 = vsyncadd [#allocation6], %s2296
      %s2299 = sshll.u32 [#allocation18], 4
      %s2300 = int_to_ptr.vmem [resolvable:$true] %s2299
      %2302 = dma.vmem_to_hbm [thread:$0]  %s2300, 32, %s11, [#allocation6]
    $region81: #{tpu_custom_call.1} parent=1 // pred_fallthru
      _
    // Predicated region
    $region82: #{tpu_custom_call.1} parent=1 // pred_check
      _
    $region83: #{tpu_custom_call.1} parent=1 // pred_check_branch
      %2304 = sbr.rel (0) target = $region85
    $region84: #{tpu_custom_call.1} parent=1 // pred_region
      %2305 = dma.done [#allocation6], 32
    $region85: #{tpu_custom_call.1} parent=1 // pred_fallthru
      _
    %2306 = vsyncpa [#allocation5], 1
    %2307 = vsyncpa [#allocation8], 1
    %2308 = vsyncpa [#allocation11], 1
    %2309 = vsyncpa [#allocation14], 1
    %2310 = vsyncpa [#allocation17], 1
    %2311 = vsyncpa [#allocation6], 1

</llo_original>
